<compile_context>
chip_gen: v5e
topology: v5e:2x2
jax: 0.10.0
libtpu: 0.0.40
codegen_flags: <defaults>
</compile_context>

<pallas_src>
import functools

import jax
import jax.numpy as jnp
from jax.experimental import pallas as pl
from jax.experimental.pallas import tpu as pltpu

EPS = 1e-5
LANE = 128          # vreg lane width
SUBLANE_BF16 = 16   # bf16 packs 16 rows per (sublane, lane) tile


def _round_up(x, m):
    return (x + m - 1) // m * m


@functools.partial(jax.jit, static_argnames=("k", "stride", "dilation", "block_rows"))
def expansion_block(x_nchw, weight, gamma, beta, k=3, stride=1, dilation=1,
                    block_rows=None, eps=EPS):
    """ExpansionBlock forward.

    x_nchw: [N, Cin, H, W]; weight: [Cin, Cout, k, k] (PyTorch ConvTranspose2d layout);
    gamma/beta: [Cout] BatchNorm affine parameters.
    """
    N, Cin, H, W = x_nchw.shape
    Cout = weight.shape[1]
    pad = dilation * (k - 1)
    Ho = (H - 1) * stride + pad + 1
    Wo = (W - 1) * stride + pad + 1
    Wo_pad = _round_up(Wo, SUBLANE_BF16)          # dense sublanes -> layout-trivial reshapes
    cout_pad = _round_up(Cout, LANE)

    # Output-row blocking: bounds per-step VMEM (out tile / accumulator / tap scratch) and gives
    # multiple grid steps per image for megacore sharding even at tiny batch sizes.
    th_max = block_rows if block_rows is not None else max(1, 512 // Wo_pad)
    th_max = max(1, min(th_max, Ho))
    MB = -(-Ho // th_max)                         # number of row blocks
    TH = -(-Ho // MB)                             # output rows per block
    Ho_pad = MB * TH
    Mb = TH * Wo_pad                              # GEMM M rows per grid step
    M_pad = Ho_pad * Wo_pad

    # --- wrapper glue: NCHW -> NHWC, bf16 *before* padding, stride zero-insertion, halo pad ---
    x = jnp.transpose(x_nchw, (0, 2, 3, 1)).astype(jnp.bfloat16)         # [N, H, W, Cin]
    if stride > 1:
        # ConvTranspose2d(stride=s) == zero-insertion (input dilation by s) followed by a
        # stride-1 correlation with the flipped kernel.
        x = jax.lax.pad(x, jnp.zeros((), x.dtype),
                        ((0, 0, 0), (0, 0, stride - 1), (0, 0, stride - 1), (0, 0, 0)))
    Hd, Wd = x.shape[1], x.shape[2]                                      # (H-1)*stride + 1
    # Padded rows/cols beyond the true Ho/Wo extent are exact zeros, so BN statistics stay exact.
    xpad = jnp.pad(x, ((0, 0),
                       (pad, Ho_pad - Hd),
                       (pad, Wo_pad - Wd),
                       (0, 0)))                    # [N, Ho_pad + pad, Wo_pad + pad, Cin]

    # ConvTranspose2d == correlation with the spatially flipped, channel-transposed kernel.
    w = jnp.transpose(weight[:, :, ::-1, ::-1].astype(jnp.float32), (2, 3, 0, 1))  # [k,k,Cin,Cout]

    if k * k * Cin <= LANE:
        # ---------- folded-tap path (small Cin): one lane-dense GEMM, no in-kernel relayout ----
        kkc = k * k * Cin
        kkc_pad = _round_up(kkc, LANE)
        slabs = [xpad[:, i * dilation:i * dilation + Ho_pad,
                      j * dilation:j * dilation + Wo_pad, :]
                 for i in range(k) for j in range(k)]
        xin = jnp.concatenate(slabs, axis=-1)                            # tap-major, cin-minor
        xin = jnp.pad(xin, ((0, 0), (0, 0), (0, 0), (0, kkc_pad - kkc)))
        xin = xin.reshape(N, M_pad, kkc_pad)                             # bf16, lane-dense
        win = jnp.pad(w.reshape(kkc, Cout),
                      ((0, kkc_pad - kkc), (0, cout_pad - Cout))).astype(jnp.bfloat16)

        def conv_stats_kernel(x_ref, w_ref, y_ref, st_ref):
            y = jnp.dot(x_ref[0], w_ref[...], preferred_element_type=jnp.float32)
            y_ref[0] = y.astype(y_ref.dtype)
            st_ref[0, 0:1, :] = jnp.sum(y, axis=0, keepdims=True)
            st_ref[0, 1:2, :] = jnp.sum(y * y, axis=0, keepdims=True)

        in_specs = [pl.BlockSpec((1, Mb, kkc_pad), lambda n, r: (n, r, 0)),
                    pl.BlockSpec((kkc_pad, cout_pad), lambda n, r: (0, 0))]
        scratch = []
    else:
        # ---------- per-tap path (large Cin): pre-shifted slabs + chained MXU accumulation ----
        cin_pad = _round_up(Cin, LANE)
        xin = jnp.pad(xpad, ((0, 0), (0, 0), (0, 0), (0, cin_pad - Cin)))     # [N, HP, WP, cin_pad]
        win = jnp.pad(w, ((0, 0), (0, 0), (0, cin_pad - Cin), (0, cout_pad - Cout)))
        win = win.reshape(k * k, cin_pad, cout_pad).astype(jnp.bfloat16)
        HP, WP = xin.shape[1], xin.shape[2]
        THk = TH + pad                                                   # rows needed per block

        def conv_stats_kernel(x_ref, w_ref, y_ref, st_ref, xs_ref):
            r0 = pl.program_id(1) * TH
            # Stage the k width-shifted slabs once per row block (k misaligned copies instead of
            # k*k); every tap below is then a free leading-axis slice + layout-trivial reshape.
            for j in range(k):
                xs_ref[j] = x_ref[0, pl.ds(r0, THk),
                                  j * dilation:j * dilation + Wo_pad, :]
            acc = None
            for i in range(k):
                for j in range(k):
                    lhs = xs_ref[j, i * dilation:i * dilation + TH].reshape(Mb, cin_pad)
                    part = jnp.dot(lhs, w_ref[i * k + j],
                                   preferred_element_type=jnp.float32)
                    acc = part if acc is None else acc + part
            y_ref[0] = acc.astype(y_ref.dtype)
            st_ref[0, 0:1, :] = jnp.sum(acc, axis=0, keepdims=True)
            st_ref[0, 1:2, :] = jnp.sum(acc * acc, axis=0, keepdims=True)

        # NOTE: the weight block index is constant, so it is DMA'd only once; the second pipeline
        # buffer is idle (pl.Buffered(1) would reclaim it for very large weights).
        in_specs = [pl.BlockSpec((1, HP, WP, cin_pad), lambda n, r: (n, 0, 0, 0)),
                    pl.BlockSpec((k * k, cin_pad, cout_pad), lambda n, r: (0, 0, 0))]
        scratch = [pltpu.VMEM((k, THk, Wo_pad, cin_pad), jnp.bfloat16)]

    flops = 2 * N * Ho * Wo * Cin * Cout * k * k                         # un-padded (advisory)
    x_bytes = int(xin.size) * 2
    w_bytes = int(win.size) * 2
    y_bytes = N * M_pad * cout_pad * 2
    st_bytes = N * MB * 2 * cout_pad * 4
    cparams = pltpu.CompilerParams(
        dimension_semantics=("parallel", "parallel"),
        vmem_limit_bytes=48 * 1024 * 1024)   # v7x-safe (64 MiB physical); raiseable on v5e/v6e

    # ---- pass 1: conv GEMM + per-row-block channel statistics (y round-trips once in bf16) ----
    y_bf, stats = pl.pallas_call(
        conv_stats_kernel,
        out_shape=(jax.ShapeDtypeStruct((N, M_pad, cout_pad), jnp.bfloat16),
                   jax.ShapeDtypeStruct((N * MB, 2, cout_pad), jnp.float32)),
        grid=(N, MB),
        in_specs=in_specs,
        out_specs=(pl.BlockSpec((1, Mb, cout_pad), lambda n, r: (n, r, 0)),
                   pl.BlockSpec((1, 2, cout_pad), lambda n, r: (n * MB + r, 0, 0))),
        scratch_shapes=scratch,
        compiler_params=cparams,
        cost_estimate=pl.CostEstimate(flops=int(flops), transcendentals=0,
                                      bytes_accessed=int(x_bytes + w_bytes + y_bytes + st_bytes)),
    )(xin, win)

    # ---- finalize BN statistics in f32 (padded rows/cols/channels contribute exact zeros) ----
    count = float(N * Ho * Wo)
    tot = jnp.sum(stats, axis=0)                                          # [2, cout_pad]
    mean = tot[0] / count
    # NOTE: single-pass E[y^2] - mean^2 in f32 is adequate for post-conv activations; switch to a
    # shifted / two-pass formulation if a layer has |mean| >> std.
    var = jnp.maximum(tot[1] / count - mean * mean, 0.0)                  # biased variance
    inv = jax.lax.rsqrt(var + eps)
    gamma_p = jnp.pad(gamma.astype(jnp.float32), (0, cout_pad - Cout))
    beta_p = jnp.pad(beta.astype(jnp.float32), (0, cout_pad - Cout))
    scale = (gamma_p * inv).reshape(1, cout_pad)
    shift = (beta_p - mean * gamma_p * inv).reshape(1, cout_pad)

    # ---- pass 2: elementwise folded-BN affine + ReLU, bf16 lane-dense writeback ----
    def bn_relu_kernel(y_ref, sc_ref, sh_ref, o_ref):
        yv = y_ref[0].astype(jnp.float32)
        o_ref[0] = jnp.maximum(yv * sc_ref[...] + sh_ref[...], 0.0).astype(o_ref.dtype)

    out_flat = pl.pallas_call(
        bn_relu_kernel,
        out_shape=jax.ShapeDtypeStruct((N, M_pad, cout_pad), jnp.bfloat16),
        grid=(N, MB),
        in_specs=[pl.BlockSpec((1, Mb, cout_pad), lambda n, r: (n, r, 0)),
                  pl.BlockSpec((1, cout_pad), lambda n, r: (0, 0)),
                  pl.BlockSpec((1, cout_pad), lambda n, r: (0, 0))],
        out_specs=pl.BlockSpec((1, Mb, cout_pad), lambda n, r: (n, r, 0)),
        compiler_params=cparams,
        cost_estimate=pl.CostEstimate(flops=int(3 * N * Ho * Wo * Cout), transcendentals=0,
                                      bytes_accessed=int(2 * y_bytes + 4 * cout_pad * 4)),
    )(y_bf, scale, shift)

    out = out_flat.reshape(N, Ho_pad, Wo_pad, cout_pad)[:, :Ho, :Wo, :Cout]
    # TODO(synk): a full-network port should keep activations NHWC / channel-padded between
    # blocks; the NCHW transpose + f32 cast here only matches the PyTorch module interface.
    return jnp.transpose(out, (0, 3, 1, 2)).astype(jnp.float32)


def _reference(x, weight, gamma, beta, k, stride=1, dilation=1, eps=EPS):
    """Pure-JAX reference on bf16-rounded operands (mirrors the kernel's bf16 y round trip)."""
    xb = x.astype(jnp.bfloat16).astype(jnp.float32)
    wb = weight.astype(jnp.bfloat16).astype(jnp.float32)
    wf = jnp.transpose(wb[:, :, ::-1, ::-1], (1, 0, 2, 3))               # [Cout, Cin, k, k]
    pad = dilation * (k - 1)
    y = jax.lax.conv_general_dilated(
        xb, wf, window_strides=(1, 1),
        padding=((pad, pad), (pad, pad)),
        lhs_dilation=(stride, stride),
        rhs_dilation=(dilation, dilation),
        dimension_numbers=("NCHW", "OIHW", "NCHW"),
        precision=jax.lax.Precision.HIGHEST)
    mean = y.mean(axis=(0, 2, 3), keepdims=True)
    var = ((y - mean) ** 2).mean(axis=(0, 2, 3), keepdims=True)
    yq = y.astype(jnp.bfloat16).astype(jnp.float32)                      # bf16 y round trip
    g = gamma.reshape(1, -1, 1, 1)
    b = beta.reshape(1, -1, 1, 1)
    return jnp.maximum((yq - mean) * jax.lax.rsqrt(var + eps) * g + b, 0.0)


if __name__ == "__main__":
    key = jax.random.PRNGKey(0)
    k1, k2, k3, k4 = jax.random.split(key, 4)
    kk = 3

    # Config A: small-Cin (folded-tap single-GEMM path), stride=2 like eb0/eb1/eb2.
    N, Cin, Cout, H, W, s = 2, 4, 8, 16, 16, 2
    xA = jax.random.normal(k1, (N, Cin, H, W), jnp.float32)
    wA = jax.random.normal(k2, (Cin, Cout, kk, kk), jnp.float32) * 0.1
    gA = jnp.ones((Cout,), jnp.float32)     # fresh BatchNorm2d.weight
    bA = jnp.zeros((Cout,), jnp.float32)    # fresh BatchNorm2d.bias
    outA = jax.block_until_ready(expansion_block(xA, wA, gA, bA, k=kk, stride=s))
    HoA, WoA = (H - 1) * s + kk, (W - 1) * s + kk
    assert outA.shape == (N, Cout, HoA, WoA)
    assert bool(jnp.all(outA >= 0.0))       # ReLU post-condition
    refA = _reference(xA, wA, gA, bA, kk, stride=s)
    errA = float(jnp.max(jnp.abs(outA - refA)))
    assert errA < 3e-2, f"config A max abs err vs reference: {errA}"

    # Config B: larger-Cin (per-tap path with pre-shifted slabs), stride=1 like ConvPipe.c2;
    # block_rows=4 forces multiple output-row blocks per image to exercise the row-block grid.
    Nb, CinB, CoutB, Hb, Wb = 2, 16, 8, 8, 8
    xB = jax.random.normal(k3, (Nb, CinB, Hb, Wb), jnp.float32)
    wB = jax.random.normal(k4, (CinB, CoutB, kk, kk), jnp.float32) * 0.05
    gB = jnp.ones((CoutB,), jnp.float32)
    bB = jnp.zeros((CoutB,), jnp.float32)
    outB = jax.block_until_ready(
        expansion_block(xB, wB, gB, bB, k=kk, stride=1, block_rows=4))
    assert outB.shape == (Nb, CoutB, Hb + kk - 1, Wb + kk - 1)
    assert bool(jnp.all(outB >= 0.0))
    refB = _reference(xB, wB, gB, bB, kk, stride=1)
    errB = float(jnp.max(jnp.abs(outB - refB)))
    assert errB < 3e-2, f"config B max abs err vs reference: {errB}"

    print("KERNEL_OK")
</pallas_src>

<mosaic_0001>
module attributes {stable_mosaic.version = 11 : i64} {
  func.func @conv_stats_kernel(%arg0: i32, %arg1: i32, %arg2: memref<1x432x128xbf16, #tpu.memory_space<vmem>>, %arg3: memref<128x128xbf16, #tpu.memory_space<vmem>>, %arg4: memref<1x432x128xbf16, #tpu.memory_space<vmem>>, %arg5: memref<1x2x128xf32, #tpu.memory_space<vmem>>) attributes {dimension_semantics = [#tpu.dimension_semantics<parallel>, #tpu.dimension_semantics<parallel>], iteration_bounds = array<i64: 2, 4>, scalar_prefetch = 0 : i64, scratch_operands = 0 : i64, tpu.core_type = #tpu.core_type<tc>, window_params = [{transform_indices = @transform_0, window_bounds = array<i64: 1, 432, 128>}, {pipeline_mode = #tpu.pipeline_mode<synchronous>, transform_indices = @transform_1, window_bounds = array<i64: 128, 128>}, {transform_indices = @transform_2, window_bounds = array<i64: 1, 432, 128>}, {transform_indices = @transform_3, window_bounds = array<i64: 1, 2, 128>}]} {
    %c0 = arith.constant 0 : index
    %c0_0 = arith.constant 0 : index
    %c0_1 = arith.constant 0 : index
    %0 = vector.load %arg2[%c0, %c0_0, %c0_1] : memref<1x432x128xbf16, #tpu.memory_space<vmem>>, vector<1x432x128xbf16>
    %1 = vector.shape_cast %0 : vector<1x432x128xbf16> to vector<432x128xbf16>
    %c0_2 = arith.constant 0 : index
    %c0_3 = arith.constant 0 : index
    %2 = vector.load %arg3[%c0_2, %c0_3] : memref<128x128xbf16, #tpu.memory_space<vmem>>, vector<128x128xbf16>
    %cst = arith.constant dense<0.000000e+00> : vector<432x128xf32>
    %3 = tpu.matmul %1, %2, %cst {dimension_numbers = #tpu.dot_dimension_numbers<[1], [0], [0], [1], [0, 0, 1, 1], [], []>} : vector<432x128xbf16>, vector<128x128xbf16>, vector<432x128xf32> -> vector<432x128xf32>
    %4 = arith.truncf %3 : vector<432x128xf32> to vector<432x128xbf16>
    %c0_4 = arith.constant 0 : index
    %c0_5 = arith.constant 0 : index
    %c0_6 = arith.constant 0 : index
    %5 = vector.load %arg4[%c0_4, %c0_5, %c0_6] : memref<1x432x128xbf16, #tpu.memory_space<vmem>>, vector<1x432x128xbf16>
    %6 = vector.shape_cast %5 : vector<1x432x128xbf16> to vector<432x128xbf16>
    %7 = vector.shape_cast %4 : vector<432x128xbf16> to vector<1x432x128xbf16>
    tpu.vector_store %arg4[%c0_4, %c0_5, %c0_6], %7 {strides = array<i32>} : memref<1x432x128xbf16, #tpu.memory_space<vmem>>, vector<1x432x128xbf16>,
    %cst_7 = arith.constant dense<0.000000e+00> : vector<128xf32>
    %8 = vector.multi_reduction <add>, %3, %cst_7 [0] : vector<432x128xf32> to vector<128xf32>
    %9 = vector.shape_cast %8 : vector<128xf32> to vector<1x128xf32>
    %c0_8 = arith.constant 0 : index
    %c0_9 = arith.constant 0 : index
    %c0_10 = arith.constant 0 : index
    %10 = vector.load %arg5[%c0_8, %c0_9, %c0_10] : memref<1x2x128xf32, #tpu.memory_space<vmem>>, vector<1x1x128xf32>
    %11 = vector.shape_cast %10 : vector<1x1x128xf32> to vector<1x128xf32>
    %12 = vector.shape_cast %9 : vector<1x128xf32> to vector<1x1x128xf32>
    tpu.vector_store %arg5[%c0_8, %c0_9, %c0_10], %12 {strides = array<i32>} : memref<1x2x128xf32, #tpu.memory_space<vmem>>, vector<1x1x128xf32>,
    %13 = arith.mulf %3, %3 : vector<432x128xf32>
    %cst_11 = arith.constant dense<0.000000e+00> : vector<128xf32>
    %14 = vector.multi_reduction <add>, %13, %cst_11 [0] : vector<432x128xf32> to vector<128xf32>
    %15 = vector.shape_cast %14 : vector<128xf32> to vector<1x128xf32>
    %c0_12 = arith.constant 0 : index
    %c1 = arith.constant 1 : index
    %c0_13 = arith.constant 0 : index
    %16 = vector.load %arg5[%c0_12, %c1, %c0_13] : memref<1x2x128xf32, #tpu.memory_space<vmem>>, vector<1x1x128xf32>
    %17 = vector.shape_cast %16 : vector<1x1x128xf32> to vector<1x128xf32>
    %18 = vector.shape_cast %15 : vector<1x128xf32> to vector<1x1x128xf32>
    tpu.vector_store %arg5[%c0_12, %c1, %c0_13], %18 {strides = array<i32>} : memref<1x2x128xf32, #tpu.memory_space<vmem>>, vector<1x1x128xf32>,
    return
  }
  func.func @transform_0(%arg0: i32, %arg1: i32) -> (i32, i32, i32) {
    %c0_i32 = arith.constant 0 : i32
    %c0_i32_0 = arith.constant 0 : i32
    return %arg0, %arg1, %c0_i32 : i32, i32, i32
  }
  func.func @transform_1(%arg0: i32, %arg1: i32) -> (i32, i32) {
    %c0_i32 = arith.constant 0 : i32
    %c0_i32_0 = arith.constant 0 : i32
    %c0_i32_1 = arith.constant 0 : i32
    return %c0_i32, %c0_i32_0 : i32, i32
  }
  func.func @transform_2(%arg0: i32, %arg1: i32) -> (i32, i32, i32) {
    %c0_i32 = arith.constant 0 : i32
    %c0_i32_0 = arith.constant 0 : i32
    return %arg0, %arg1, %c0_i32 : i32, i32, i32
  }
  func.func @transform_3(%arg0: i32, %arg1: i32) -> (i32, i32, i32) {
    %c4_i32 = arith.constant 4 : i32
    %0 = arith.muli %arg0, %c4_i32 : i32
    %1 = arith.addi %0, %arg1 : i32
    %c0_i32 = arith.constant 0 : i32
    %c0_i32_0 = arith.constant 0 : i32
    %c0_i32_1 = arith.constant 0 : i32
    return %1, %c0_i32, %c0_i32_0 : i32, i32, i32
  }
}

module attributes {stable_mosaic.version = 11 : i64} {
  func.func @bn_relu_kernel(%arg0: i32, %arg1: i32, %arg2: memref<1x432x128xbf16, #tpu.memory_space<vmem>>, %arg3: memref<1x128xf32, #tpu.memory_space<vmem>>, %arg4: memref<1x128xf32, #tpu.memory_space<vmem>>, %arg5: memref<1x432x128xbf16, #tpu.memory_space<vmem>>) attributes {dimension_semantics = [#tpu.dimension_semantics<parallel>, #tpu.dimension_semantics<parallel>], iteration_bounds = array<i64: 2, 4>, scalar_prefetch = 0 : i64, scratch_operands = 0 : i64, tpu.core_type = #tpu.core_type<tc>, window_params = [{transform_indices = @transform_0, window_bounds = array<i64: 1, 432, 128>}, {pipeline_mode = #tpu.pipeline_mode<synchronous>, transform_indices = @transform_1, window_bounds = array<i64: 1, 128>}, {pipeline_mode = #tpu.pipeline_mode<synchronous>, transform_indices = @transform_2, window_bounds = array<i64: 1, 128>}, {transform_indices = @transform_3, window_bounds = array<i64: 1, 432, 128>}]} {
    %c0 = arith.constant 0 : index
    %c0_0 = arith.constant 0 : index
    %c0_1 = arith.constant 0 : index
    %0 = vector.load %arg2[%c0, %c0_0, %c0_1] : memref<1x432x128xbf16, #tpu.memory_space<vmem>>, vector<1x432x128xbf16>
    %1 = vector.shape_cast %0 : vector<1x432x128xbf16> to vector<432x128xbf16>
    %2 = arith.extf %1 : vector<432x128xbf16> to vector<432x128xf32>
    %c0_2 = arith.constant 0 : index
    %c0_3 = arith.constant 0 : index
    %3 = vector.load %arg3[%c0_2, %c0_3] : memref<1x128xf32, #tpu.memory_space<vmem>>, vector<1x128xf32>
    %4 = vector.broadcast %3 : vector<1x128xf32> to vector<432x128xf32>
    %5 = arith.mulf %2, %4 : vector<432x128xf32>
    %c0_4 = arith.constant 0 : index
    %c0_5 = arith.constant 0 : index
    %6 = vector.load %arg4[%c0_4, %c0_5] : memref<1x128xf32, #tpu.memory_space<vmem>>, vector<1x128xf32>
    %7 = vector.broadcast %6 : vector<1x128xf32> to vector<432x128xf32>
    %8 = arith.addf %5, %7 : vector<432x128xf32>
    %cst = arith.constant 0.000000e+00 : f32
    %9 = vector.broadcast %cst : f32 to vector<432x128xf32>
    %10 = arith.maximumf %8, %9 : vector<432x128xf32>
    %11 = arith.truncf %10 : vector<432x128xf32> to vector<432x128xbf16>
    %c0_6 = arith.constant 0 : index
    %c0_7 = arith.constant 0 : index
    %c0_8 = arith.constant 0 : index
    %12 = vector.load %arg5[%c0_6, %c0_7, %c0_8] : memref<1x432x128xbf16, #tpu.memory_space<vmem>>, vector<1x432x128xbf16>
    %13 = vector.shape_cast %12 : vector<1x432x128xbf16> to vector<432x128xbf16>
    %14 = vector.shape_cast %11 : vector<432x128xbf16> to vector<1x432x128xbf16>
    tpu.vector_store %arg5[%c0_6, %c0_7, %c0_8], %14 {strides = array<i32>} : memref<1x432x128xbf16, #tpu.memory_space<vmem>>, vector<1x432x128xbf16>,
    return
  }
  func.func @transform_0(%arg0: i32, %arg1: i32) -> (i32, i32, i32) {
    %c0_i32 = arith.constant 0 : i32
    %c0_i32_0 = arith.constant 0 : i32
    return %arg0, %arg1, %c0_i32 : i32, i32, i32
  }
  func.func @transform_1(%arg0: i32, %arg1: i32) -> (i32, i32) {
    %c0_i32 = arith.constant 0 : i32
    %c0_i32_0 = arith.constant 0 : i32
    %c0_i32_1 = arith.constant 0 : i32
    return %c0_i32, %c0_i32_0 : i32, i32
  }
  func.func @transform_2(%arg0: i32, %arg1: i32) -> (i32, i32) {
    %c0_i32 = arith.constant 0 : i32
    %c0_i32_0 = arith.constant 0 : i32
    %c0_i32_1 = arith.constant 0 : i32
    return %c0_i32, %c0_i32_0 : i32, i32
  }
  func.func @transform_3(%arg0: i32, %arg1: i32) -> (i32, i32, i32) {
    %c0_i32 = arith.constant 0 : i32
    %c0_i32_0 = arith.constant 0 : i32
    return %arg0, %arg1, %c0_i32 : i32, i32, i32
  }
}

</mosaic_0001>

<llo_original>
// kernel: expansion_block.3
$region0: #{expansion_block.3}
  #allocation0 [shape = 'u32[]', space=smem, size = 0x4, offset = 0x4, fixed_abs, tag = 'smem constant byte address 0x4 - core index']
  #allocation1 [shape = 'u32[72,128]{1,0:T(1,128)}', space=vmem, size = 0x9000, scoped, tag = 'internal scratch']
  %s0 = inlined_call_operand.vmem [shape: bf16[2,1728,128], index: 0, kind: input, shape index: {}]
  %s1 = inlined_call_operand.vmem [shape: f32[1,128], index: 1, kind: input, shape index: {}]
  %s2 = inlined_call_operand.vmem [shape: f32[1,128], index: 2, kind: input, shape index: {}]
  %s3 = inlined_call_operand.vmem [shape: bf16[2,1728,128], index: 3, kind: output, shape index: {}]
  %s4 = sld [smem:[#allocation0]]
  $region45: #{expansion_block.3} parent=0
    _
  %s6 = ssub.s32 1, %s4
  %s7 = scalar_select 0, %s6, %s4
  loop: start=0, step=1, limit=10
  $region2: #{expansion_block.3} parent=0 // loop_pre_header
    _
  $region3: #{expansion_block.3} parent=0 // loop_header
    %s9 = sphi 0, %s13
    %p10 = scmp.ge.s32.totalorder %s9, 10
    %s16 = sphi 0, %s28
    %s17 = sphi 0, %s24
    %s18 = sphi 0, %s16
    %s19 = sphi 0, %s17
    %s20 = sphi 0, %s18
    %s21 = sphi 0, %s19
    %s33 = sphi 0, %s35
    %s36 = sphi 0, %s33
    %s37 = sphi 0, %s36
    %s53 = sphi 0, %s37
    %s57 = sphi 0, %s57
    %s59 = sphi 0, %s57
    %s60 = sphi 0, %s59
    %s74 = sphi 0, %s60
    %s78 = sphi 0, %s78
    %s80 = sphi 0, %s78
    %s81 = sphi 0, %s80
    %s95 = sphi 0, %s81
    %s103 = sphi 0, %s105
    %s106 = sphi 0, %s103
    %s107 = sphi 0, %s106
    %s123 = sphi 0, %s107
  $region4: #{expansion_block.3} parent=0 // loop_header_branch
    %12 = sbr.rel (%p10) target = $region8
  $region5: #{expansion_block.3} parent=0 // loop_body
    %s14 = ssub.s32 %s9, 1
    %s15 = ssub.s32 %s9, 2
    %s22 = sadd.s32 1, %s17
    %p23 = scmp.ge.s32.totalorder %s22, 4
    %s24 = scalar_select %p23, 0, %s22
    %s25 = sadd.s32 1, %s16
    %s26 = scalar_select %p23, %s25, %s16
    %p27 = scmp.ge.s32.totalorder %s26, 2
    %s28 = scalar_select %p27, 0, %s26
    %s29 = ssub.s32 %s16, %s28
    %s30 = ssub.s32 %s17, %s24
    %s31 = sor.u32 %s29, %s30
    %p32 = scmp.eq.s32.totalorder %s31, 0
    %s34 = sadd.s32 %s33, 1
    %s35 = scalar_select %p32, %s33, %s34
    %p38 = pneg %p32
    %p39 = scmp.eq.s32.totalorder %s9, 7
    %p40 = por %p38, %p39
    %p41 = scmp.ne.s32.totalorder %s33, %s36
    %p42 = scmp.eq.s32.totalorder %s9, 0
    %p43 = por %p41, %p42
    %p44 = scmp.ne.s32.totalorder %s33, %s36
    %p45 = scmp.eq.s32.totalorder %s14, 7
    %p46 = por %p44, %p45
    %p47 = scmp.ne.s32.totalorder %s36, %s37
    %p48 = scmp.eq.s32.totalorder %s14, 0
    %p49 = por %p47, %p48
    %p50 = scmp.ne.s32.totalorder %s36, %s37
    %p51 = scmp.eq.s32.totalorder %s15, 7
    %p52 = por %p50, %p51
    %p54 = scmp.ne.s32.totalorder %s37, %s53
    %p55 = scmp.eq.s32.totalorder %s15, 0
    %p56 = por %p54, %p55
    %s58 = sadd.s32 %s57, 1
    %p61 = scmp.eq.s32.totalorder %s9, 7
    %p62 = scmp.ne.s32.totalorder %s57, %s59
    %p63 = scmp.eq.s32.totalorder %s9, 0
    %p64 = por %p62, %p63
    %p65 = scmp.ne.s32.totalorder %s57, %s59
    %p66 = scmp.eq.s32.totalorder %s14, 7
    %p67 = por %p65, %p66
    %p68 = scmp.ne.s32.totalorder %s59, %s60
    %p69 = scmp.eq.s32.totalorder %s14, 0
    %p70 = por %p68, %p69
    %p71 = scmp.ne.s32.totalorder %s59, %s60
    %p72 = scmp.eq.s32.totalorder %s15, 7
    %p73 = por %p71, %p72
    %p75 = scmp.ne.s32.totalorder %s60, %s74
    %p76 = scmp.eq.s32.totalorder %s15, 0
    %p77 = por %p75, %p76
    %s79 = sadd.s32 %s78, 1
    %p82 = scmp.eq.s32.totalorder %s9, 7
    %p83 = scmp.ne.s32.totalorder %s78, %s80
    %p84 = scmp.eq.s32.totalorder %s9, 0
    %p85 = por %p83, %p84
    %p86 = scmp.ne.s32.totalorder %s78, %s80
    %p87 = scmp.eq.s32.totalorder %s14, 7
    %p88 = por %p86, %p87
    %p89 = scmp.ne.s32.totalorder %s80, %s81
    %p90 = scmp.eq.s32.totalorder %s14, 0
    %p91 = por %p89, %p90
    %p92 = scmp.ne.s32.totalorder %s80, %s81
    %p93 = scmp.eq.s32.totalorder %s15, 7
    %p94 = por %p92, %p93
    %p96 = scmp.ne.s32.totalorder %s81, %s95
    %p97 = scmp.eq.s32.totalorder %s15, 0
    %p98 = por %p96, %p97
    %s99 = ssub.s32 %s16, %s28
    %s100 = ssub.s32 %s17, %s24
    %s101 = sor.u32 %s99, %s100
    %p102 = scmp.eq.s32.totalorder %s101, 0
    %s104 = sadd.s32 %s103, 1
    %s105 = scalar_select %p102, %s103, %s104
    %p108 = pneg %p102
    %p109 = scmp.eq.s32.totalorder %s9, 7
    %p110 = por %p108, %p109
    %p111 = scmp.ne.s32.totalorder %s103, %s106
    %p112 = scmp.eq.s32.totalorder %s9, 0
    %p113 = por %p111, %p112
    %p114 = scmp.ne.s32.totalorder %s103, %s106
    %p115 = scmp.eq.s32.totalorder %s14, 7
    %p116 = por %p114, %p115
    %p117 = scmp.ne.s32.totalorder %s106, %s107
    %p118 = scmp.eq.s32.totalorder %s14, 0
    %p119 = por %p117, %p118
    %p120 = scmp.ne.s32.totalorder %s106, %s107
    %p121 = scmp.eq.s32.totalorder %s15, 7
    %p122 = por %p120, %p121
    %p124 = scmp.ne.s32.totalorder %s107, %s123
    %p125 = scmp.eq.s32.totalorder %s15, 0
    %p126 = por %p124, %p125
    %p127 = scmp.le.s32.totalorder 1, %s9
    %p128 = scmp.lt.s32.totalorder %s9, 9
    %p129 = pnand %p127, %p128
    %p130 = pneg %p129
    // Predicated region
    $region9: #{expansion_block.3} parent=5 // pred_check
      _
    $region10: #{expansion_block.3} parent=5 // pred_check_branch
      %132 = sbr.rel (%p129) target = $region12
    $region11: #{expansion_block.3} parent=5 // pred_region
      %s133 = ssub.s32 %s9, 1
      // Predicated region
      $region13: #{expansion_block.3} parent=11 // pred_check
        %p134 = pneg %p70
      $region14: #{expansion_block.3} parent=11 // pred_check_branch
        %136 = sbr.rel (%p134) target = $region16
      $region15: #{expansion_block.3} parent=11 // pred_region
        _
      $region16: #{expansion_block.3} parent=11 // pred_fallthru
        _
      // Predicated region
      $region17: #{expansion_block.3} parent=11 // pred_check
        %p137 = pneg %p91
      $region18: #{expansion_block.3} parent=11 // pred_check_branch
        %139 = sbr.rel (%p137) target = $region20
      $region19: #{expansion_block.3} parent=11 // pred_region
        _
      $region20: #{expansion_block.3} parent=11 // pred_fallthru
        _
    $region12: #{expansion_block.3} parent=5 // pred_fallthru
      _
    %p140 = scmp.lt.s32.totalorder %s9, 8
    // Predicated region
    $region21: #{expansion_block.3} parent=5 // pred_check
      %p141 = pneg %p140
    $region22: #{expansion_block.3} parent=5 // pred_check_branch
      %143 = sbr.rel (%p141) target = $region24
    $region23: #{expansion_block.3} parent=5 // pred_region
      // Predicated region
      $region25: #{expansion_block.3} parent=23 // pred_check
        %p144 = pneg %p43
      $region26: #{expansion_block.3} parent=23 // pred_check_branch
        %146 = sbr.rel (%p144) target = $region28
      $region27: #{expansion_block.3} parent=23 // pred_region
        %s147 = smul.u32 54, %s17
        %p148 = scmp.lt.s32.totalorder %s16, 1
        %s149 = scalar_select %p148, %s16, 1
        %p150 = scmp.lt.s32.totalorder %s147, 215
        %s151 = scalar_select %p150, %s147, 215
        %s152 = smul.addr %s149, 216
        %s153 = sadd.s32 %s151, %s152
        %s154 = smul.addr %s153, 4
        %s155 = scalar_lea.vmem %s0, %s154
        %s156 = smul.u32 54, %s17
      $region28: #{expansion_block.3} parent=23 // pred_fallthru
        _
    $region24: #{expansion_block.3} parent=5 // pred_fallthru
      _
    %p157 = scmp.le.s32.totalorder 1, %s9
    %p158 = scmp.lt.s32.totalorder %s9, 9
    %p159 = pnand %p157, %p158
    %p160 = pneg %p159
    // Predicated region
    $region29: #{expansion_block.3} parent=5 // pred_check
      _
    $region30: #{expansion_block.3} parent=5 // pred_check_branch
      %162 = sbr.rel (%p159) target = $region32
    $region31: #{expansion_block.3} parent=5 // pred_region
      %s163 = ssub.s32 %s9, 1
      %s164 = smul.u32 54, %s19
      %p165 = scmp.lt.s32.totalorder %s18, 1
      %s166 = scalar_select %p165, %s18, 1
      %p167 = scmp.lt.s32.totalorder %s164, 215
      %s168 = scalar_select %p167, %s164, 215
      %s169 = smul.addr %s166, 216
      %s170 = sadd.s32 %s168, %s169
      %s171 = smul.addr %s170, 4
      %s172 = scalar_lea.vmem %s0, %s171
      %p173 = pneg %p49
      %p174 = pneg %p46
      %p175 = pneg %p70
      %p176 = pneg %p67
      %p177 = pneg %p91
      %p178 = pneg %p88
      %p179 = pneg %p119
      %p180 = pneg %p116
      %s181 = smul.u32 54, %s19
      %p182 = scmp.lt.s32.totalorder %s18, 1
      %s183 = scalar_select %p182, %s18, 1
      %p184 = scmp.lt.s32.totalorder %s181, 215
      %s185 = scalar_select %p184, %s181, 215
      %s186 = smul.addr %s183, 216
      %s187 = sadd.s32 %s185, %s186
      %s188 = smul.addr %s187, 4
      %s189 = scalar_lea.vmem %s3, %s188
      %s190 = smul.u32 54, %s19
      %p191 = scmp.lt.s32.totalorder %s18, 1
      %s192 = scalar_select %p191, %s18, 1
      %p193 = scmp.lt.s32.totalorder %s190, 215
      %s194 = scalar_select %p193, %s190, 215
      %s195 = smul.addr %s192, 216
      %s196 = sadd.s32 %s194, %s195
      %s197 = smul.addr %s196, 4
      %s198 = scalar_lea.vmem %s0, %s197
      %s199 = smul.u32 54, %s19
      %s200 = smul.u32 54, %s19
      %p201 = scmp.lt.s32.totalorder %s18, 1
      %s202 = scalar_select %p201, %s18, 1
      %p203 = scmp.lt.s32.totalorder %s200, 215
      %s204 = scalar_select %p203, %s200, 215
      %s205 = smul.addr %s202, 216
      %s206 = sadd.s32 %s204, %s205
      %s207 = smul.addr %s206, 4
      %s208 = scalar_lea.vmem %s3, %s207
      %s209 = smul.u32 54, %s19
      %v210 = vld [vmem:[%s198] sm:$0xf]
      %v211 = vld [vmem:[%s198 + $0x4] sm:$0xf]
      %v212 = vld [vmem:[%s198 + $0x8] sm:$0xf]
      %v213 = vld [vmem:[%s198 + $0xc] sm:$0xf]
      %v214 = vld [vmem:[%s198 + $0x10] sm:$0xf]
      %v215 = vld [vmem:[%s198 + $0x14] sm:$0xf]
      %v216 = vld [vmem:[%s198 + $0x18] sm:$0xf]
      %v217 = vld [vmem:[%s198 + $0x1c] sm:$0xf]
      %v218 = vld [vmem:[%s198 + $0x20] sm:$0xf]
      %v219 = vld [vmem:[%s198 + $0x24] sm:$0xf]
      %v220 = vld [vmem:[%s198 + $0x28] sm:$0xf]
      %v221 = vld [vmem:[%s198 + $0x2c] sm:$0xf]
      %v222 = vld [vmem:[%s198 + $0x30] sm:$0xf]
      %v223 = vld [vmem:[%s198 + $0x34] sm:$0xf]
      %v224 = vld [vmem:[%s198 + $0x38] sm:$0xf]
      %v225 = vld [vmem:[%s198 + $0x3c] sm:$0xf]
      %v226 = vld [vmem:[%s198 + $0x40] sm:$0xf]
      %v227 = vld [vmem:[%s198 + $0x44] sm:$0xf]
      %v228 = vld [vmem:[%s198 + $0x48] sm:$0xf]
      %v229 = vld [vmem:[%s198 + $0x4c] sm:$0xf]
      %v230 = vld [vmem:[%s198 + $0x50] sm:$0xf]
      %v231 = vld [vmem:[%s198 + $0x54] sm:$0xf]
      %v232 = vld [vmem:[%s198 + $0x58] sm:$0xf]
      %v233 = vld [vmem:[%s198 + $0x5c] sm:$0xf]
      %v234 = vld [vmem:[%s198 + $0x60] sm:$0xf]
      %v235 = vld [vmem:[%s198 + $0x64] sm:$0xf]
      %v236 = vld [vmem:[%s198 + $0x68] sm:$0xf]
      %v237 = vld [vmem:[%s198 + $0x6c] sm:$0xf]
      %v238 = vld [vmem:[%s198 + $0x70] sm:$0xf]
      %v239 = vld [vmem:[%s198 + $0x74] sm:$0xf]
      %v240 = vld [vmem:[%s198 + $0x78] sm:$0xf]
      %v241 = vld [vmem:[%s198 + $0x7c] sm:$0xf]
      %v242 = vld [vmem:[%s198 + $0x80] sm:$0xf]
      %v243 = vld [vmem:[%s198 + $0x84] sm:$0xf]
      %v244 = vld [vmem:[%s198 + $0x88] sm:$0xf]
      %v245 = vld [vmem:[%s198 + $0x8c] sm:$0xf]
      %v246 = vld [vmem:[%s198 + $0x90] sm:$0xf]
      %v247 = vld [vmem:[%s198 + $0x94] sm:$0xf]
      %v248 = vld [vmem:[%s198 + $0x98] sm:$0xf]
      %v249 = vld [vmem:[%s198 + $0x9c] sm:$0xf]
      %v250 = vld [vmem:[%s198 + $0xa0] sm:$0xf]
      %v251 = vld [vmem:[%s198 + $0xa4] sm:$0xf]
      %v252 = vld [vmem:[%s198 + $0xa8] sm:$0xf]
      %v253 = vld [vmem:[%s198 + $0xac] sm:$0xf]
      %v254 = vld [vmem:[%s198 + $0xb0] sm:$0xf]
      %v255 = vld [vmem:[%s198 + $0xb4] sm:$0xf]
      %v256 = vld [vmem:[%s198 + $0xb8] sm:$0xf]
      %v257 = vld [vmem:[%s198 + $0xbc] sm:$0xf]
      %v258 = vld [vmem:[%s198 + $0xc0] sm:$0xf]
      %v259 = vld [vmem:[%s198 + $0xc4] sm:$0xf]
      %v260 = vld [vmem:[%s198 + $0xc8] sm:$0xf]
      %v261 = vld [vmem:[%s198 + $0xcc] sm:$0xf]
      %v262 = vld [vmem:[%s198 + $0xd0] sm:$0xf]
      %v263 = vld [vmem:[%s198 + $0xd4] sm:$0xf]
      %v264 = vunpack.c.l.bf16 %v210
      %v265 = vunpack.c.l.bf16 %v211
      %v266 = vunpack.c.l.bf16 %v212
      %v267 = vunpack.c.l.bf16 %v213
      %v268 = vunpack.c.l.bf16 %v214
      %v269 = vunpack.c.l.bf16 %v215
      %v270 = vunpack.c.l.bf16 %v216
      %v271 = vunpack.c.l.bf16 %v217
      %v272 = vunpack.c.l.bf16 %v218
      %v273 = vunpack.c.l.bf16 %v219
      %v274 = vunpack.c.l.bf16 %v220
      %v275 = vunpack.c.l.bf16 %v221
      %v276 = vunpack.c.l.bf16 %v222
      %v277 = vunpack.c.l.bf16 %v223
      %v278 = vunpack.c.l.bf16 %v224
      %v279 = vunpack.c.l.bf16 %v225
      %v280 = vunpack.c.l.bf16 %v226
      %v281 = vunpack.c.l.bf16 %v227
      %v282 = vunpack.c.l.bf16 %v228
      %v283 = vunpack.c.l.bf16 %v229
      %v284 = vunpack.c.l.bf16 %v230
      %v285 = vunpack.c.l.bf16 %v231
      %v286 = vunpack.c.l.bf16 %v232
      %v287 = vunpack.c.l.bf16 %v233
      %v288 = vunpack.c.l.bf16 %v234
      %v289 = vunpack.c.l.bf16 %v235
      %v290 = vunpack.c.l.bf16 %v236
      %v291 = vunpack.c.l.bf16 %v237
      %v292 = vunpack.c.l.bf16 %v238
      %v293 = vunpack.c.l.bf16 %v239
      %v294 = vunpack.c.l.bf16 %v240
      %v295 = vunpack.c.l.bf16 %v241
      %v296 = vunpack.c.l.bf16 %v242
      %v297 = vunpack.c.l.bf16 %v243
      %v298 = vunpack.c.l.bf16 %v244
      %v299 = vunpack.c.l.bf16 %v245
      %v300 = vunpack.c.l.bf16 %v246
      %v301 = vunpack.c.l.bf16 %v247
      %v302 = vunpack.c.l.bf16 %v248
      %v303 = vunpack.c.l.bf16 %v249
      %v304 = vunpack.c.l.bf16 %v250
      %v305 = vunpack.c.l.bf16 %v251
      %v306 = vunpack.c.l.bf16 %v252
      %v307 = vunpack.c.l.bf16 %v253
      %v308 = vunpack.c.l.bf16 %v254
      %v309 = vunpack.c.l.bf16 %v255
      %v310 = vunpack.c.l.bf16 %v256
      %v311 = vunpack.c.l.bf16 %v257
      %v312 = vunpack.c.l.bf16 %v258
      %v313 = vunpack.c.l.bf16 %v259
      %v314 = vunpack.c.l.bf16 %v260
      %v315 = vunpack.c.l.bf16 %v261
      %v316 = vunpack.c.l.bf16 %v262
      %v317 = vunpack.c.l.bf16 %v263
      %v318 = vld [vmem:[%s1] sm:$0x1]
      %v320 = vperm.slane %v318, 0
      %v322 = vmul.f32 %v264, %v320
      %v323 = vmul.f32 %v265, %v320
      %v324 = vmul.f32 %v266, %v320
      %v325 = vmul.f32 %v267, %v320
      %v326 = vmul.f32 %v268, %v320
      %v327 = vmul.f32 %v269, %v320
      %v328 = vmul.f32 %v270, %v320
      %v329 = vmul.f32 %v271, %v320
      %v330 = vmul.f32 %v272, %v320
      %v331 = vmul.f32 %v273, %v320
      %v332 = vmul.f32 %v274, %v320
      %v333 = vmul.f32 %v275, %v320
      %v334 = vmul.f32 %v276, %v320
      %v335 = vmul.f32 %v277, %v320
      %v336 = vmul.f32 %v278, %v320
      %v337 = vmul.f32 %v279, %v320
      %v338 = vmul.f32 %v280, %v320
      %v339 = vmul.f32 %v281, %v320
      %v340 = vmul.f32 %v282, %v320
      %v341 = vmul.f32 %v283, %v320
      %v342 = vmul.f32 %v284, %v320
      %v343 = vmul.f32 %v285, %v320
      %v344 = vmul.f32 %v286, %v320
      %v345 = vmul.f32 %v287, %v320
      %v346 = vmul.f32 %v288, %v320
      %v347 = vmul.f32 %v289, %v320
      %v348 = vmul.f32 %v290, %v320
      %v349 = vmul.f32 %v291, %v320
      %v350 = vmul.f32 %v292, %v320
      %v351 = vmul.f32 %v293, %v320
      %v352 = vmul.f32 %v294, %v320
      %v353 = vmul.f32 %v295, %v320
      %v354 = vmul.f32 %v296, %v320
      %v355 = vmul.f32 %v297, %v320
      %v356 = vmul.f32 %v298, %v320
      %v357 = vmul.f32 %v299, %v320
      %v358 = vmul.f32 %v300, %v320
      %v359 = vmul.f32 %v301, %v320
      %v360 = vmul.f32 %v302, %v320
      %v361 = vmul.f32 %v303, %v320
      %v362 = vmul.f32 %v304, %v320
      %v363 = vmul.f32 %v305, %v320
      %v364 = vmul.f32 %v306, %v320
      %v365 = vmul.f32 %v307, %v320
      %v366 = vmul.f32 %v308, %v320
      %v367 = vmul.f32 %v309, %v320
      %v368 = vmul.f32 %v310, %v320
      %v369 = vmul.f32 %v311, %v320
      %v370 = vmul.f32 %v312, %v320
      %v371 = vmul.f32 %v313, %v320
      %v372 = vmul.f32 %v314, %v320
      %v373 = vmul.f32 %v315, %v320
      %v374 = vmul.f32 %v316, %v320
      %v375 = vmul.f32 %v317, %v320
      %v376 = vld [vmem:[%s2] sm:$0x1]
      %v378 = vperm.slane %v376, 0
      %v380 = vadd.f32 %v322, %v378
      %v381 = vadd.f32 %v323, %v378
      %v382 = vadd.f32 %v324, %v378
      %v383 = vadd.f32 %v325, %v378
      %v384 = vadd.f32 %v326, %v378
      %v385 = vadd.f32 %v327, %v378
      %v386 = vadd.f32 %v328, %v378
      %v387 = vadd.f32 %v329, %v378
      %v388 = vadd.f32 %v330, %v378
      %v389 = vadd.f32 %v331, %v378
      %v390 = vadd.f32 %v332, %v378
      %v391 = vadd.f32 %v333, %v378
      %v392 = vadd.f32 %v334, %v378
      %v393 = vadd.f32 %v335, %v378
      %v394 = vadd.f32 %v336, %v378
      %v395 = vadd.f32 %v337, %v378
      %v396 = vadd.f32 %v338, %v378
      %v397 = vadd.f32 %v339, %v378
      %v398 = vadd.f32 %v340, %v378
      %v399 = vadd.f32 %v341, %v378
      %v400 = vadd.f32 %v342, %v378
      %v401 = vadd.f32 %v343, %v378
      %v402 = vadd.f32 %v344, %v378
      %v403 = vadd.f32 %v345, %v378
      %v404 = vadd.f32 %v346, %v378
      %v405 = vadd.f32 %v347, %v378
      %v406 = vadd.f32 %v348, %v378
      %v407 = vadd.f32 %v349, %v378
      %v408 = vadd.f32 %v350, %v378
      %v409 = vadd.f32 %v351, %v378
      %v410 = vadd.f32 %v352, %v378
      %v411 = vadd.f32 %v353, %v378
      %v412 = vadd.f32 %v354, %v378
      %v413 = vadd.f32 %v355, %v378
      %v414 = vadd.f32 %v356, %v378
      %v415 = vadd.f32 %v357, %v378
      %v416 = vadd.f32 %v358, %v378
      %v417 = vadd.f32 %v359, %v378
      %v418 = vadd.f32 %v360, %v378
      %v419 = vadd.f32 %v361, %v378
      %v420 = vadd.f32 %v362, %v378
      %v421 = vadd.f32 %v363, %v378
      %v422 = vadd.f32 %v364, %v378
      %v423 = vadd.f32 %v365, %v378
      %v424 = vadd.f32 %v366, %v378
      %v425 = vadd.f32 %v367, %v378
      %v426 = vadd.f32 %v368, %v378
      %v427 = vadd.f32 %v369, %v378
      %v428 = vadd.f32 %v370, %v378
      %v429 = vadd.f32 %v371, %v378
      %v430 = vadd.f32 %v372, %v378
      %v431 = vadd.f32 %v373, %v378
      %v432 = vadd.f32 %v374, %v378
      %v433 = vadd.f32 %v375, %v378
      %v434 = vmax.f32 %v380, 0.0
      %v435 = vmax.f32 %v381, 0.0
      %v436 = vmax.f32 %v382, 0.0
      %v437 = vmax.f32 %v383, 0.0
      %v438 = vmax.f32 %v384, 0.0
      %v439 = vmax.f32 %v385, 0.0
      %v440 = vmax.f32 %v386, 0.0
      %v441 = vmax.f32 %v387, 0.0
      %v442 = vmax.f32 %v388, 0.0
      %v443 = vmax.f32 %v389, 0.0
      %v444 = vmax.f32 %v390, 0.0
      %v445 = vmax.f32 %v391, 0.0
      %v446 = vmax.f32 %v392, 0.0
      %v447 = vmax.f32 %v393, 0.0
      %v448 = vmax.f32 %v394, 0.0
      %v449 = vmax.f32 %v395, 0.0
      %v450 = vmax.f32 %v396, 0.0
      %v451 = vmax.f32 %v397, 0.0
      %v452 = vmax.f32 %v398, 0.0
      %v453 = vmax.f32 %v399, 0.0
      %v454 = vmax.f32 %v400, 0.0
      %v455 = vmax.f32 %v401, 0.0
      %v456 = vmax.f32 %v402, 0.0
      %v457 = vmax.f32 %v403, 0.0
      %v458 = vmax.f32 %v404, 0.0
      %v459 = vmax.f32 %v405, 0.0
      %v460 = vmax.f32 %v406, 0.0
      %v461 = vmax.f32 %v407, 0.0
      %v462 = vmax.f32 %v408, 0.0
      %v463 = vmax.f32 %v409, 0.0
      %v464 = vmax.f32 %v410, 0.0
      %v465 = vmax.f32 %v411, 0.0
      %v466 = vmax.f32 %v412, 0.0
      %v467 = vmax.f32 %v413, 0.0
      %v468 = vmax.f32 %v414, 0.0
      %v469 = vmax.f32 %v415, 0.0
      %v470 = vmax.f32 %v416, 0.0
      %v471 = vmax.f32 %v417, 0.0
      %v472 = vmax.f32 %v418, 0.0
      %v473 = vmax.f32 %v419, 0.0
      %v474 = vmax.f32 %v420, 0.0
      %v475 = vmax.f32 %v421, 0.0
      %v476 = vmax.f32 %v422, 0.0
      %v477 = vmax.f32 %v423, 0.0
      %v478 = vmax.f32 %v424, 0.0
      %v479 = vmax.f32 %v425, 0.0
      %v480 = vmax.f32 %v426, 0.0
      %v481 = vmax.f32 %v427, 0.0
      %v482 = vmax.f32 %v428, 0.0
      %v483 = vmax.f32 %v429, 0.0
      %v484 = vmax.f32 %v430, 0.0
      %v485 = vmax.f32 %v431, 0.0
      %v486 = vmax.f32 %v432, 0.0
      %v487 = vmax.f32 %v433, 0.0
      %v488 = vpack.c.bf16 %v434, %v434
      %v489 = vpack.c.bf16 %v435, %v435
      %v490 = vpack.c.bf16 %v436, %v436
      %v491 = vpack.c.bf16 %v437, %v437
      %v492 = vpack.c.bf16 %v438, %v438
      %v493 = vpack.c.bf16 %v439, %v439
      %v494 = vpack.c.bf16 %v440, %v440
      %v495 = vpack.c.bf16 %v441, %v441
      %v496 = vpack.c.bf16 %v442, %v442
      %v497 = vpack.c.bf16 %v443, %v443
      %v498 = vpack.c.bf16 %v444, %v444
      %v499 = vpack.c.bf16 %v445, %v445
      %v500 = vpack.c.bf16 %v446, %v446
      %v501 = vpack.c.bf16 %v447, %v447
      %v502 = vpack.c.bf16 %v448, %v448
      %v503 = vpack.c.bf16 %v449, %v449
      %v504 = vpack.c.bf16 %v450, %v450
      %v505 = vpack.c.bf16 %v451, %v451
      %v506 = vpack.c.bf16 %v452, %v452
      %v507 = vpack.c.bf16 %v453, %v453
      %v508 = vpack.c.bf16 %v454, %v454
      %v509 = vpack.c.bf16 %v455, %v455
      %v510 = vpack.c.bf16 %v456, %v456
      %v511 = vpack.c.bf16 %v457, %v457
      %v512 = vpack.c.bf16 %v458, %v458
      %v513 = vpack.c.bf16 %v459, %v459
      %v514 = vpack.c.bf16 %v460, %v460
      %v515 = vpack.c.bf16 %v461, %v461
      %v516 = vpack.c.bf16 %v462, %v462
      %v517 = vpack.c.bf16 %v463, %v463
      %v518 = vpack.c.bf16 %v464, %v464
      %v519 = vpack.c.bf16 %v465, %v465
      %v520 = vpack.c.bf16 %v466, %v466
      %v521 = vpack.c.bf16 %v467, %v467
      %v522 = vpack.c.bf16 %v468, %v468
      %v523 = vpack.c.bf16 %v469, %v469
      %v524 = vpack.c.bf16 %v470, %v470
      %v525 = vpack.c.bf16 %v471, %v471
      %v526 = vpack.c.bf16 %v472, %v472
      %v527 = vpack.c.bf16 %v473, %v473
      %v528 = vpack.c.bf16 %v474, %v474
      %v529 = vpack.c.bf16 %v475, %v475
      %v530 = vpack.c.bf16 %v476, %v476
      %v531 = vpack.c.bf16 %v477, %v477
      %v532 = vpack.c.bf16 %v478, %v478
      %v533 = vpack.c.bf16 %v479, %v479
      %v534 = vpack.c.bf16 %v480, %v480
      %v535 = vpack.c.bf16 %v481, %v481
      %v536 = vpack.c.bf16 %v482, %v482
      %v537 = vpack.c.bf16 %v483, %v483
      %v538 = vpack.c.bf16 %v484, %v484
      %v539 = vpack.c.bf16 %v485, %v485
      %v540 = vpack.c.bf16 %v486, %v486
      %v541 = vpack.c.bf16 %v487, %v487
      %542 = vst [vmem:[%s208] sm:$0xf] %v488
      %543 = vst [vmem:[%s208 + $0x4] sm:$0xf] %v489
      %544 = vst [vmem:[%s208 + $0x8] sm:$0xf] %v490
      %545 = vst [vmem:[%s208 + $0xc] sm:$0xf] %v491
      %546 = vst [vmem:[%s208 + $0x10] sm:$0xf] %v492
      %547 = vst [vmem:[%s208 + $0x14] sm:$0xf] %v493
      %548 = vst [vmem:[%s208 + $0x18] sm:$0xf] %v494
      %549 = vst [vmem:[%s208 + $0x1c] sm:$0xf] %v495
      %550 = vst [vmem:[%s208 + $0x20] sm:$0xf] %v496
      %551 = vst [vmem:[%s208 + $0x24] sm:$0xf] %v497
      %552 = vst [vmem:[%s208 + $0x28] sm:$0xf] %v498
      %553 = vst [vmem:[%s208 + $0x2c] sm:$0xf] %v499
      %554 = vst [vmem:[%s208 + $0x30] sm:$0xf] %v500
      %555 = vst [vmem:[%s208 + $0x34] sm:$0xf] %v501
      %556 = vst [vmem:[%s208 + $0x38] sm:$0xf] %v502
      %557 = vst [vmem:[%s208 + $0x3c] sm:$0xf] %v503
      %558 = vst [vmem:[%s208 + $0x40] sm:$0xf] %v504
      %559 = vst [vmem:[%s208 + $0x44] sm:$0xf] %v505
      %560 = vst [vmem:[%s208 + $0x48] sm:$0xf] %v506
      %561 = vst [vmem:[%s208 + $0x4c] sm:$0xf] %v507
      %562 = vst [vmem:[%s208 + $0x50] sm:$0xf] %v508
      %563 = vst [vmem:[%s208 + $0x54] sm:$0xf] %v509
      %564 = vst [vmem:[%s208 + $0x58] sm:$0xf] %v510
      %565 = vst [vmem:[%s208 + $0x5c] sm:$0xf] %v511
      %566 = vst [vmem:[%s208 + $0x60] sm:$0xf] %v512
      %567 = vst [vmem:[%s208 + $0x64] sm:$0xf] %v513
      %568 = vst [vmem:[%s208 + $0x68] sm:$0xf] %v514
      %569 = vst [vmem:[%s208 + $0x6c] sm:$0xf] %v515
      %570 = vst [vmem:[%s208 + $0x70] sm:$0xf] %v516
      %571 = vst [vmem:[%s208 + $0x74] sm:$0xf] %v517
      %572 = vst [vmem:[%s208 + $0x78] sm:$0xf] %v518
      %573 = vst [vmem:[%s208 + $0x7c] sm:$0xf] %v519
      %574 = vst [vmem:[%s208 + $0x80] sm:$0xf] %v520
      %575 = vst [vmem:[%s208 + $0x84] sm:$0xf] %v521
      %576 = vst [vmem:[%s208 + $0x88] sm:$0xf] %v522
      %577 = vst [vmem:[%s208 + $0x8c] sm:$0xf] %v523
      %578 = vst [vmem:[%s208 + $0x90] sm:$0xf] %v524
      %579 = vst [vmem:[%s208 + $0x94] sm:$0xf] %v525
      %580 = vst [vmem:[%s208 + $0x98] sm:$0xf] %v526
      %581 = vst [vmem:[%s208 + $0x9c] sm:$0xf] %v527
      %582 = vst [vmem:[%s208 + $0xa0] sm:$0xf] %v528
      %583 = vst [vmem:[%s208 + $0xa4] sm:$0xf] %v529
      %584 = vst [vmem:[%s208 + $0xa8] sm:$0xf] %v530
      %585 = vst [vmem:[%s208 + $0xac] sm:$0xf] %v531
      %586 = vst [vmem:[%s208 + $0xb0] sm:$0xf] %v532
      %587 = vst [vmem:[%s208 + $0xb4] sm:$0xf] %v533
      %588 = vst [vmem:[%s208 + $0xb8] sm:$0xf] %v534
      %589 = vst [vmem:[%s208 + $0xbc] sm:$0xf] %v535
      %590 = vst [vmem:[%s208 + $0xc0] sm:$0xf] %v536
      %591 = vst [vmem:[%s208 + $0xc4] sm:$0xf] %v537
      %592 = vst [vmem:[%s208 + $0xc8] sm:$0xf] %v538
      %593 = vst [vmem:[%s208 + $0xcc] sm:$0xf] %v539
      %594 = vst [vmem:[%s208 + $0xd0] sm:$0xf] %v540
      %595 = vst [vmem:[%s208 + $0xd4] sm:$0xf] %v541
      %s596 = smul.u32 54, %s19
      %p597 = scmp.lt.s32.totalorder %s18, 1
      %s598 = scalar_select %p597, %s18, 1
      %p599 = scmp.lt.s32.totalorder %s596, 215
      %s600 = scalar_select %p599, %s596, 215
      %s601 = smul.addr %s598, 216
      %s602 = sadd.s32 %s600, %s601
      %s603 = smul.addr %s602, 4
      %s604 = scalar_lea.vmem %s3, %s603
      // Predicated region
      $region33: #{expansion_block.3} parent=31 // pred_check
        %p605 = pneg %p116
      $region34: #{expansion_block.3} parent=31 // pred_check_branch
        %607 = sbr.rel (%p605) target = $region36
      $region35: #{expansion_block.3} parent=31 // pred_region
        %s608 = smul.u32 54, %s19
      $region36: #{expansion_block.3} parent=31 // pred_fallthru
        _
    $region32: #{expansion_block.3} parent=5 // pred_fallthru
      _
    %p609 = scmp.le.s32.totalorder 2, %s9
    // Predicated region
    $region37: #{expansion_block.3} parent=5 // pred_check
      %p610 = pneg %p609
    $region38: #{expansion_block.3} parent=5 // pred_check_branch
      %612 = sbr.rel (%p610) target = $region40
    $region39: #{expansion_block.3} parent=5 // pred_region
      %s613 = ssub.s32 %s9, 2
      // Predicated region
      $region41: #{expansion_block.3} parent=39 // pred_check
        %p614 = pneg %p122
      $region42: #{expansion_block.3} parent=39 // pred_check_branch
        %616 = sbr.rel (%p614) target = $region44
      $region43: #{expansion_block.3} parent=39 // pred_region
        %s617 = smul.u32 54, %s21
        %p618 = scmp.lt.s32.totalorder %s20, 1
        %s619 = scalar_select %p618, %s20, 1
        %p620 = scmp.lt.s32.totalorder %s617, 215
        %s621 = scalar_select %p620, %s617, 215
        %s622 = smul.addr %s619, 216
        %s623 = sadd.s32 %s621, %s622
        %s624 = smul.addr %s623, 4
        %s625 = scalar_lea.vmem %s3, %s624
      $region44: #{expansion_block.3} parent=39 // pred_fallthru
        _
    $region40: #{expansion_block.3} parent=5 // pred_fallthru
      _
  $region6: #{expansion_block.3} parent=0 // loop_footer
    %s13 = sadd.s32 1, %s9
  $region7: #{expansion_block.3} parent=0 // loop_footer_branch
    %8 = sbr.rel target = $region3
  $region8: #{expansion_block.3} parent=0 // loop_exit
    _

// kernel: expansion_block.2
$region0: #{expansion_block.2}
  #allocation0 [shape = 'u32[]', space=smem, size = 0x4, offset = 0x4, fixed_abs, tag = 'smem constant byte address 0x4 - core index']
  #allocation1 [shape = 'u32[72,128]{1,0:T(1,128)}', space=vmem, size = 0x9000, scoped, tag = 'internal scratch']
  %s0 = inlined_call_operand.vmem [shape: bf16[2,1728,128], index: 0, kind: input, shape index: {}]
  %s1 = inlined_call_operand.vmem [shape: bf16[128,128], index: 1, kind: input, shape index: {}]
  %s2 = inlined_call_operand.vmem [shape: bf16[2,1728,128], index: 2, kind: output, shape index: {0}]
  %s3 = inlined_call_operand.vmem [shape: f32[8,2,128], index: 3, kind: output, shape index: {1}]
  %4 = xla_tuple %s2, %s3
  %s5 = sld [smem:[#allocation0]]
  $region49: #{expansion_block.2} parent=0
    _
  %s7 = ssub.s32 1, %s5
  %s8 = scalar_select 0, %s7, %s5
  loop: start=0, step=1, limit=10
  $region2: #{expansion_block.2} parent=0 // loop_pre_header
    _
  $region3: #{expansion_block.2} parent=0 // loop_header
    %s10 = sphi 0, %s14
    %p11 = scmp.ge.s32.totalorder %s10, 10
    %s17 = sphi 0, %s29
    %s18 = sphi 0, %s25
    %s19 = sphi 0, %s17
    %s20 = sphi 0, %s18
    %s21 = sphi 0, %s19
    %s22 = sphi 0, %s20
    %s34 = sphi 0, %s36
    %s37 = sphi 0, %s34
    %s38 = sphi 0, %s37
    %s54 = sphi 0, %s38
    %s58 = sphi 0, %s58
    %s60 = sphi 0, %s58
    %s61 = sphi 0, %s60
    %s75 = sphi 0, %s61
    %s83 = sphi 0, %s85
    %s86 = sphi 0, %s83
    %s87 = sphi 0, %s86
    %s103 = sphi 0, %s87
    %s113 = sphi 0, %s115
    %s116 = sphi 0, %s113
    %s117 = sphi 0, %s116
    %s133 = sphi 0, %s117
  $region4: #{expansion_block.2} parent=0 // loop_header_branch
    %13 = sbr.rel (%p11) target = $region8
  $region5: #{expansion_block.2} parent=0 // loop_body
    %s15 = ssub.s32 %s10, 1
    %s16 = ssub.s32 %s10, 2
    %s23 = sadd.s32 1, %s18
    %p24 = scmp.ge.s32.totalorder %s23, 4
    %s25 = scalar_select %p24, 0, %s23
    %s26 = sadd.s32 1, %s17
    %s27 = scalar_select %p24, %s26, %s17
    %p28 = scmp.ge.s32.totalorder %s27, 2
    %s29 = scalar_select %p28, 0, %s27
    %s30 = ssub.s32 %s17, %s29
    %s31 = ssub.s32 %s18, %s25
    %s32 = sor.u32 %s30, %s31
    %p33 = scmp.eq.s32.totalorder %s32, 0
    %s35 = sadd.s32 %s34, 1
    %s36 = scalar_select %p33, %s34, %s35
    %p39 = pneg %p33
    %p40 = scmp.eq.s32.totalorder %s10, 7
    %p41 = por %p39, %p40
    %p42 = scmp.ne.s32.totalorder %s34, %s37
    %p43 = scmp.eq.s32.totalorder %s10, 0
    %p44 = por %p42, %p43
    %p45 = scmp.ne.s32.totalorder %s34, %s37
    %p46 = scmp.eq.s32.totalorder %s15, 7
    %p47 = por %p45, %p46
    %p48 = scmp.ne.s32.totalorder %s37, %s38
    %p49 = scmp.eq.s32.totalorder %s15, 0
    %p50 = por %p48, %p49
    %p51 = scmp.ne.s32.totalorder %s37, %s38
    %p52 = scmp.eq.s32.totalorder %s16, 7
    %p53 = por %p51, %p52
    %p55 = scmp.ne.s32.totalorder %s38, %s54
    %p56 = scmp.eq.s32.totalorder %s16, 0
    %p57 = por %p55, %p56
    %s59 = sadd.s32 %s58, 1
    %p62 = scmp.eq.s32.totalorder %s10, 7
    %p63 = scmp.ne.s32.totalorder %s58, %s60
    %p64 = scmp.eq.s32.totalorder %s10, 0
    %p65 = por %p63, %p64
    %p66 = scmp.ne.s32.totalorder %s58, %s60
    %p67 = scmp.eq.s32.totalorder %s15, 7
    %p68 = por %p66, %p67
    %p69 = scmp.ne.s32.totalorder %s60, %s61
    %p70 = scmp.eq.s32.totalorder %s15, 0
    %p71 = por %p69, %p70
    %p72 = scmp.ne.s32.totalorder %s60, %s61
    %p73 = scmp.eq.s32.totalorder %s16, 7
    %p74 = por %p72, %p73
    %p76 = scmp.ne.s32.totalorder %s61, %s75
    %p77 = scmp.eq.s32.totalorder %s16, 0
    %p78 = por %p76, %p77
    %s79 = ssub.s32 %s17, %s29
    %s80 = ssub.s32 %s18, %s25
    %s81 = sor.u32 %s79, %s80
    %p82 = scmp.eq.s32.totalorder %s81, 0
    %s84 = sadd.s32 %s83, 1
    %s85 = scalar_select %p82, %s83, %s84
    %p88 = pneg %p82
    %p89 = scmp.eq.s32.totalorder %s10, 7
    %p90 = por %p88, %p89
    %p91 = scmp.ne.s32.totalorder %s83, %s86
    %p92 = scmp.eq.s32.totalorder %s10, 0
    %p93 = por %p91, %p92
    %p94 = scmp.ne.s32.totalorder %s83, %s86
    %p95 = scmp.eq.s32.totalorder %s15, 7
    %p96 = por %p94, %p95
    %p97 = scmp.ne.s32.totalorder %s86, %s87
    %p98 = scmp.eq.s32.totalorder %s15, 0
    %p99 = por %p97, %p98
    %p100 = scmp.ne.s32.totalorder %s86, %s87
    %p101 = scmp.eq.s32.totalorder %s16, 7
    %p102 = por %p100, %p101
    %p104 = scmp.ne.s32.totalorder %s87, %s103
    %p105 = scmp.eq.s32.totalorder %s16, 0
    %p106 = por %p104, %p105
    %s107 = smul.u32 %s17, 4
    %s108 = sadd.s32 %s107, %s18
    %s109 = smul.u32 %s29, 4
    %s110 = sadd.s32 %s109, %s25
    %s111 = ssub.s32 %s108, %s110
    %p112 = scmp.eq.s32.totalorder %s111, 0
    %s114 = sadd.s32 %s113, 1
    %s115 = scalar_select %p112, %s113, %s114
    %p118 = pneg %p112
    %p119 = scmp.eq.s32.totalorder %s10, 7
    %p120 = por %p118, %p119
    %p121 = scmp.ne.s32.totalorder %s113, %s116
    %p122 = scmp.eq.s32.totalorder %s10, 0
    %p123 = por %p121, %p122
    %p124 = scmp.ne.s32.totalorder %s113, %s116
    %p125 = scmp.eq.s32.totalorder %s15, 7
    %p126 = por %p124, %p125
    %p127 = scmp.ne.s32.totalorder %s116, %s117
    %p128 = scmp.eq.s32.totalorder %s15, 0
    %p129 = por %p127, %p128
    %p130 = scmp.ne.s32.totalorder %s116, %s117
    %p131 = scmp.eq.s32.totalorder %s16, 7
    %p132 = por %p130, %p131
    %p134 = scmp.ne.s32.totalorder %s117, %s133
    %p135 = scmp.eq.s32.totalorder %s16, 0
    %p136 = por %p134, %p135
    %p137 = scmp.le.s32.totalorder 1, %s10
    %p138 = scmp.lt.s32.totalorder %s10, 9
    %p139 = pnand %p137, %p138
    %p140 = pneg %p139
    // Predicated region
    $region9: #{expansion_block.2} parent=5 // pred_check
      _
    $region10: #{expansion_block.2} parent=5 // pred_check_branch
      %142 = sbr.rel (%p139) target = $region12
    $region11: #{expansion_block.2} parent=5 // pred_region
      %s143 = ssub.s32 %s10, 1
      // Predicated region
      $region13: #{expansion_block.2} parent=11 // pred_check
        %p144 = pneg %p71
      $region14: #{expansion_block.2} parent=11 // pred_check_branch
        %146 = sbr.rel (%p144) target = $region16
      $region15: #{expansion_block.2} parent=11 // pred_region
        _
      $region16: #{expansion_block.2} parent=11 // pred_fallthru
        _
    $region12: #{expansion_block.2} parent=5 // pred_fallthru
      _
    %p147 = scmp.lt.s32.totalorder %s10, 8
    // Predicated region
    $region17: #{expansion_block.2} parent=5 // pred_check
      %p148 = pneg %p147
    $region18: #{expansion_block.2} parent=5 // pred_check_branch
      %150 = sbr.rel (%p148) target = $region20
    $region19: #{expansion_block.2} parent=5 // pred_region
      // Predicated region
      $region21: #{expansion_block.2} parent=19 // pred_check
        %p151 = pneg %p44
      $region22: #{expansion_block.2} parent=19 // pred_check_branch
        %153 = sbr.rel (%p151) target = $region24
      $region23: #{expansion_block.2} parent=19 // pred_region
        %s154 = smul.u32 54, %s18
        %p155 = scmp.lt.s32.totalorder %s17, 1
        %s156 = scalar_select %p155, %s17, 1
        %p157 = scmp.lt.s32.totalorder %s154, 215
        %s158 = scalar_select %p157, %s154, 215
        %s159 = smul.addr %s156, 216
        %s160 = sadd.s32 %s158, %s159
        %s161 = smul.addr %s160, 4
        %s162 = scalar_lea.vmem %s0, %s161
        %s163 = smul.u32 54, %s18
      $region24: #{expansion_block.2} parent=19 // pred_fallthru
        _
    $region20: #{expansion_block.2} parent=5 // pred_fallthru
      _
    %p164 = scmp.le.s32.totalorder 1, %s10
    %p165 = scmp.lt.s32.totalorder %s10, 9
    %p166 = pnand %p164, %p165
    %p167 = pneg %p166
    // Predicated region
    $region25: #{expansion_block.2} parent=5 // pred_check
      _
    $region26: #{expansion_block.2} parent=5 // pred_check_branch
      %169 = sbr.rel (%p166) target = $region28
    $region27: #{expansion_block.2} parent=5 // pred_region
      %s170 = ssub.s32 %s10, 1
      %s171 = smul.u32 54, %s20
      %p172 = scmp.lt.s32.totalorder %s19, 1
      %s173 = scalar_select %p172, %s19, 1
      %p174 = scmp.lt.s32.totalorder %s171, 215
      %s175 = scalar_select %p174, %s171, 215
      %s176 = smul.addr %s173, 216
      %s177 = sadd.s32 %s175, %s176
      %s178 = smul.addr %s177, 4
      %s179 = scalar_lea.vmem %s0, %s178
      %p180 = pneg %p50
      %p181 = pneg %p47
      %p182 = pneg %p71
      %p183 = pneg %p68
      %p184 = pneg %p99
      %p185 = pneg %p96
      %s186 = smul.u32 54, %s20
      %p187 = scmp.lt.s32.totalorder %s19, 1
      %s188 = scalar_select %p187, %s19, 1
      %p189 = scmp.lt.s32.totalorder %s186, 215
      %s190 = scalar_select %p189, %s186, 215
      %s191 = smul.addr %s188, 216
      %s192 = sadd.s32 %s190, %s191
      %s193 = smul.addr %s192, 4
      %s194 = scalar_lea.vmem %s2, %s193
      %p195 = pneg %p129
      %p196 = pneg %p126
      %s197 = smul.u32 %s19, 4
      %s198 = sadd.s32 %s197, %s20
      %p199 = scmp.lt.s32.totalorder %s198, 7
      %s200 = scalar_select %p199, %s198, 7
      %s201 = smul.addr %s200, 2
      %s202 = scalar_lea.vmem %s3, %s201
      %s203 = smul.u32 54, %s20
      %p204 = scmp.lt.s32.totalorder %s19, 1
      %s205 = scalar_select %p204, %s19, 1
      %p206 = scmp.lt.s32.totalorder %s203, 215
      %s207 = scalar_select %p206, %s203, 215
      %s208 = smul.addr %s205, 216
      %s209 = sadd.s32 %s207, %s208
      %s210 = smul.addr %s209, 4
      %s211 = scalar_lea.vmem %s0, %s210
      %s212 = smul.u32 54, %s20
      %s213 = smul.u32 54, %s20
      %p214 = scmp.lt.s32.totalorder %s19, 1
      %s215 = scalar_select %p214, %s19, 1
      %p216 = scmp.lt.s32.totalorder %s213, 215
      %s217 = scalar_select %p216, %s213, 215
      %s218 = smul.addr %s215, 216
      %s219 = sadd.s32 %s217, %s218
      %s220 = smul.addr %s219, 4
      %s221 = scalar_lea.vmem %s2, %s220
      %s222 = smul.u32 54, %s20
      %s223 = smul.u32 %s19, 4
      %s224 = sadd.s32 %s223, %s20
      %p225 = scmp.lt.s32.totalorder %s224, 7
      %s226 = scalar_select %p225, %s224, 7
      %s227 = smul.addr %s226, 2
      %s228 = scalar_lea.vmem %s3, %s227
      %s229 = smul.u32 %s19, 4
      %s230 = sadd.s32 %s229, %s20
      %v231 = vld [vmem:[%s211] sm:$0xf]
      %v232 = vld [vmem:[%s211 + $0x4] sm:$0xf]
      %v233 = vld [vmem:[%s211 + $0x8] sm:$0xf]
      %v234 = vld [vmem:[%s211 + $0xc] sm:$0xf]
      %v235 = vld [vmem:[%s211 + $0x10] sm:$0xf]
      %v236 = vld [vmem:[%s211 + $0x14] sm:$0xf]
      %v237 = vld [vmem:[%s211 + $0x18] sm:$0xf]
      %v238 = vld [vmem:[%s211 + $0x1c] sm:$0xf]
      %v239 = vld [vmem:[%s211 + $0x20] sm:$0xf]
      %v240 = vld [vmem:[%s211 + $0x24] sm:$0xf]
      %v241 = vld [vmem:[%s211 + $0x28] sm:$0xf]
      %v242 = vld [vmem:[%s211 + $0x2c] sm:$0xf]
      %v243 = vld [vmem:[%s211 + $0x30] sm:$0xf]
      %v244 = vld [vmem:[%s211 + $0x34] sm:$0xf]
      %v245 = vld [vmem:[%s211 + $0x38] sm:$0xf]
      %v246 = vld [vmem:[%s211 + $0x3c] sm:$0xf]
      %v247 = vld [vmem:[%s211 + $0x40] sm:$0xf]
      %v248 = vld [vmem:[%s211 + $0x44] sm:$0xf]
      %v249 = vld [vmem:[%s211 + $0x48] sm:$0xf]
      %v250 = vld [vmem:[%s211 + $0x4c] sm:$0xf]
      %v251 = vld [vmem:[%s211 + $0x50] sm:$0xf]
      %v252 = vld [vmem:[%s211 + $0x54] sm:$0xf]
      %v253 = vld [vmem:[%s211 + $0x58] sm:$0xf]
      %v254 = vld [vmem:[%s211 + $0x5c] sm:$0xf]
      %v255 = vld [vmem:[%s211 + $0x60] sm:$0xf]
      %v256 = vld [vmem:[%s211 + $0x64] sm:$0xf]
      %v257 = vld [vmem:[%s211 + $0x68] sm:$0xf]
      %v258 = vld [vmem:[%s211 + $0x6c] sm:$0xf]
      %v259 = vld [vmem:[%s211 + $0x70] sm:$0xf]
      %v260 = vld [vmem:[%s211 + $0x74] sm:$0xf]
      %v261 = vld [vmem:[%s211 + $0x78] sm:$0xf]
      %v262 = vld [vmem:[%s211 + $0x7c] sm:$0xf]
      %v263 = vld [vmem:[%s211 + $0x80] sm:$0xf]
      %v264 = vld [vmem:[%s211 + $0x84] sm:$0xf]
      %v265 = vld [vmem:[%s211 + $0x88] sm:$0xf]
      %v266 = vld [vmem:[%s211 + $0x8c] sm:$0xf]
      %v267 = vld [vmem:[%s211 + $0x90] sm:$0xf]
      %v268 = vld [vmem:[%s211 + $0x94] sm:$0xf]
      %v269 = vld [vmem:[%s211 + $0x98] sm:$0xf]
      %v270 = vld [vmem:[%s211 + $0x9c] sm:$0xf]
      %v271 = vld [vmem:[%s211 + $0xa0] sm:$0xf]
      %v272 = vld [vmem:[%s211 + $0xa4] sm:$0xf]
      %v273 = vld [vmem:[%s211 + $0xa8] sm:$0xf]
      %v274 = vld [vmem:[%s211 + $0xac] sm:$0xf]
      %v275 = vld [vmem:[%s211 + $0xb0] sm:$0xf]
      %v276 = vld [vmem:[%s211 + $0xb4] sm:$0xf]
      %v277 = vld [vmem:[%s211 + $0xb8] sm:$0xf]
      %v278 = vld [vmem:[%s211 + $0xbc] sm:$0xf]
      %v279 = vld [vmem:[%s211 + $0xc0] sm:$0xf]
      %v280 = vld [vmem:[%s211 + $0xc4] sm:$0xf]
      %v281 = vld [vmem:[%s211 + $0xc8] sm:$0xf]
      %v282 = vld [vmem:[%s211 + $0xcc] sm:$0xf]
      %v283 = vld [vmem:[%s211 + $0xd0] sm:$0xf]
      %v284 = vld [vmem:[%s211 + $0xd4] sm:$0xf]
      %v285 = vld [vmem:[%s1] sm:$0xf]
      %v286 = vld [vmem:[%s1 + $0x4] sm:$0xf]
      %v287 = vld [vmem:[%s1 + $0x8] sm:$0xf]
      %v288 = vld [vmem:[%s1 + $0xc] sm:$0xf]
      %v289 = vld [vmem:[%s1 + $0x10] sm:$0xf]
      %v290 = vld [vmem:[%s1 + $0x14] sm:$0xf]
      %v291 = vld [vmem:[%s1 + $0x18] sm:$0xf]
      %v292 = vld [vmem:[%s1 + $0x1c] sm:$0xf]
      %v293 = vld [vmem:[%s1 + $0x20] sm:$0xf]
      %v294 = vld [vmem:[%s1 + $0x24] sm:$0xf]
      %v295 = vld [vmem:[%s1 + $0x28] sm:$0xf]
      %v296 = vld [vmem:[%s1 + $0x2c] sm:$0xf]
      %v297 = vld [vmem:[%s1 + $0x30] sm:$0xf]
      %v298 = vld [vmem:[%s1 + $0x34] sm:$0xf]
      %v299 = vld [vmem:[%s1 + $0x38] sm:$0xf]
      %v300 = vld [vmem:[%s1 + $0x3c] sm:$0xf]
      %v355 = vunpack.c.l.b16 %v231
      %v356 = vunpack.c.l.b16 %v232
      %v357 = vunpack.c.l.b16 %v233
      %v358 = vunpack.c.l.b16 %v234
      %v359 = vunpack.c.l.b16 %v235
      %v360 = vunpack.c.l.b16 %v236
      %v361 = vunpack.c.l.b16 %v237
      %v362 = vunpack.c.l.b16 %v238
      %v363 = vunpack.c.l.b16 %v239
      %v364 = vunpack.c.l.b16 %v240
      %v365 = vunpack.c.l.b16 %v241
      %v366 = vunpack.c.l.b16 %v242
      %v367 = vunpack.c.l.b16 %v243
      %v368 = vunpack.c.l.b16 %v244
      %v369 = vunpack.c.l.b16 %v245
      %v370 = vunpack.c.l.b16 %v246
      %v371 = vunpack.c.l.b16 %v247
      %v372 = vunpack.c.l.b16 %v248
      %v373 = vunpack.c.l.b16 %v249
      %v374 = vunpack.c.l.b16 %v250
      %v375 = vunpack.c.l.b16 %v251
      %v376 = vunpack.c.l.b16 %v252
      %v377 = vunpack.c.l.b16 %v253
      %v378 = vunpack.c.l.b16 %v254
      %v379 = vunpack.c.l.b16 %v255
      %v380 = vunpack.c.l.b16 %v256
      %v381 = vunpack.c.l.b16 %v257
      %v382 = vunpack.c.l.b16 %v258
      %v383 = vunpack.c.l.b16 %v259
      %v384 = vunpack.c.l.b16 %v260
      %v385 = vunpack.c.l.b16 %v261
      %v386 = vunpack.c.l.b16 %v262
      %v387 = vunpack.c.l.b16 %v263
      %v388 = vunpack.c.l.b16 %v264
      %v389 = vunpack.c.l.b16 %v265
      %v390 = vunpack.c.l.b16 %v266
      %v391 = vunpack.c.l.b16 %v267
      %v392 = vunpack.c.l.b16 %v268
      %v393 = vunpack.c.l.b16 %v269
      %v394 = vunpack.c.l.b16 %v270
      %v395 = vunpack.c.l.b16 %v271
      %v396 = vunpack.c.l.b16 %v272
      %v397 = vunpack.c.l.b16 %v273
      %v398 = vunpack.c.l.b16 %v274
      %v399 = vunpack.c.l.b16 %v275
      %v400 = vunpack.c.l.b16 %v276
      %v401 = vunpack.c.l.b16 %v277
      %v402 = vunpack.c.l.b16 %v278
      %v403 = vunpack.c.l.b16 %v279
      %v404 = vunpack.c.l.b16 %v280
      %v405 = vunpack.c.l.b16 %v281
      %v406 = vunpack.c.l.b16 %v282
      %v407 = vunpack.c.l.b16 %v283
      %v408 = vunpack.c.l.b16 %v284
      %v409 = vpack.c.b16 %v356, %v355
      %v410 = vpack.c.b16 %v358, %v357
      %v411 = vpack.c.b16 %v360, %v359
      %v412 = vpack.c.b16 %v362, %v361
      %v413 = vpack.c.b16 %v364, %v363
      %v414 = vpack.c.b16 %v366, %v365
      %v415 = vpack.c.b16 %v368, %v367
      %v416 = vpack.c.b16 %v370, %v369
      %v417 = vpack.c.b16 %v372, %v371
      %v418 = vpack.c.b16 %v374, %v373
      %v419 = vpack.c.b16 %v376, %v375
      %v420 = vpack.c.b16 %v378, %v377
      %v421 = vpack.c.b16 %v380, %v379
      %v422 = vpack.c.b16 %v382, %v381
      %v423 = vpack.c.b16 %v384, %v383
      %v424 = vpack.c.b16 %v386, %v385
      %v425 = vpack.c.b16 %v388, %v387
      %v426 = vpack.c.b16 %v390, %v389
      %v427 = vpack.c.b16 %v392, %v391
      %v428 = vpack.c.b16 %v394, %v393
      %v429 = vpack.c.b16 %v396, %v395
      %v430 = vpack.c.b16 %v398, %v397
      %v431 = vpack.c.b16 %v400, %v399
      %v432 = vpack.c.b16 %v402, %v401
      %v433 = vpack.c.b16 %v404, %v403
      %v434 = vpack.c.b16 %v406, %v405
      %v435 = vpack.c.b16 %v408, %v407
      %v479 = vunpack.c.l.b16 %v285
      %v480 = vunpack.c.l.b16 %v286
      %v481 = vunpack.c.l.b16 %v287
      %v482 = vunpack.c.l.b16 %v288
      %v483 = vunpack.c.l.b16 %v289
      %v484 = vunpack.c.l.b16 %v290
      %v485 = vunpack.c.l.b16 %v291
      %v486 = vunpack.c.l.b16 %v292
      %v487 = vunpack.c.l.b16 %v293
      %v488 = vunpack.c.l.b16 %v294
      %v489 = vunpack.c.l.b16 %v295
      %v490 = vunpack.c.l.b16 %v296
      %v491 = vunpack.c.l.b16 %v297
      %v492 = vunpack.c.l.b16 %v298
      %v493 = vunpack.c.l.b16 %v299
      %v494 = vunpack.c.l.b16 %v300
      %v495 = vpack.c.b16 %v480, %v479
      %v496 = vpack.c.b16 %v482, %v481
      %v497 = vpack.c.b16 %v484, %v483
      %v498 = vpack.c.b16 %v486, %v485
      %v499 = vpack.c.b16 %v488, %v487
      %v500 = vpack.c.b16 %v490, %v489
      %v501 = vpack.c.b16 %v492, %v491
      %v502 = vpack.c.b16 %v494, %v493
      %511 = vmatpush.bf16.msra.mxu0 %v502
      %512 = vmatpush.bf16.msra.mxu0 %v501
      %513 = vmatpush.bf16.msra.mxu0 %v500
      %514 = vmatpush.bf16.msra.mxu0 %v499
      %515 = vmatpush.bf16.msra.mxu0 %v498
      %516 = vmatpush.bf16.msra.mxu0 %v497
      %517 = vmatpush.bf16.msra.mxu0 %v496
      %518 = vmatpush.bf16.msra.mxu0 %v495
      %519 = vmatmul.bf16.gmra.mxu0 %v409
      %v520 = vpop.f32.mrf.mxu0
      %v521 = vadd.f32 0.0, %v520
      %v522 = vpop.f32.mrf.mxu0
      %v523 = vadd.f32 0.0, %v522
      %524 = vmatmul.bf16.gmra.mxu0 %v410
      %v525 = vpop.f32.mrf.mxu0
      %v526 = vadd.f32 0.0, %v525
      %v527 = vpop.f32.mrf.mxu0
      %v528 = vadd.f32 0.0, %v527
      %529 = vmatmul.bf16.gmra.mxu0 %v411
      %v530 = vpop.f32.mrf.mxu0
      %v531 = vadd.f32 0.0, %v530
      %v532 = vpop.f32.mrf.mxu0
      %v533 = vadd.f32 0.0, %v532
      %534 = vmatmul.bf16.gmra.mxu0 %v412
      %v535 = vpop.f32.mrf.mxu0
      %v536 = vadd.f32 0.0, %v535
      %v537 = vpop.f32.mrf.mxu0
      %v538 = vadd.f32 0.0, %v537
      %539 = vmatmul.bf16.gmra.mxu0 %v413
      %v540 = vpop.f32.mrf.mxu0
      %v541 = vadd.f32 0.0, %v540
      %v542 = vpop.f32.mrf.mxu0
      %v543 = vadd.f32 0.0, %v542
      %544 = vmatmul.bf16.gmra.mxu0 %v414
      %v545 = vpop.f32.mrf.mxu0
      %v546 = vadd.f32 0.0, %v545
      %v547 = vpop.f32.mrf.mxu0
      %v548 = vadd.f32 0.0, %v547
      %549 = vmatmul.bf16.gmra.mxu0 %v415
      %v550 = vpop.f32.mrf.mxu0
      %v551 = vadd.f32 0.0, %v550
      %v552 = vpop.f32.mrf.mxu0
      %v553 = vadd.f32 0.0, %v552
      %554 = vmatmul.bf16.gmra.mxu0 %v416
      %v555 = vpop.f32.mrf.mxu0
      %v556 = vadd.f32 0.0, %v555
      %v557 = vpop.f32.mrf.mxu0
      %v558 = vadd.f32 0.0, %v557
      %559 = vmatmul.bf16.gmra.mxu0 %v417
      %v560 = vpop.f32.mrf.mxu0
      %v561 = vadd.f32 0.0, %v560
      %v562 = vpop.f32.mrf.mxu0
      %v563 = vadd.f32 0.0, %v562
      %564 = vmatmul.bf16.gmra.mxu0 %v418
      %v565 = vpop.f32.mrf.mxu0
      %v566 = vadd.f32 0.0, %v565
      %v567 = vpop.f32.mrf.mxu0
      %v568 = vadd.f32 0.0, %v567
      %569 = vmatmul.bf16.gmra.mxu0 %v419
      %v570 = vpop.f32.mrf.mxu0
      %v571 = vadd.f32 0.0, %v570
      %v572 = vpop.f32.mrf.mxu0
      %v573 = vadd.f32 0.0, %v572
      %574 = vmatmul.bf16.gmra.mxu0 %v420
      %v575 = vpop.f32.mrf.mxu0
      %v576 = vadd.f32 0.0, %v575
      %v577 = vpop.f32.mrf.mxu0
      %v578 = vadd.f32 0.0, %v577
      %579 = vmatmul.bf16.gmra.mxu0 %v421
      %v580 = vpop.f32.mrf.mxu0
      %v581 = vadd.f32 0.0, %v580
      %v582 = vpop.f32.mrf.mxu0
      %v583 = vadd.f32 0.0, %v582
      %584 = vmatmul.bf16.gmra.mxu0 %v422
      %v585 = vpop.f32.mrf.mxu0
      %v586 = vadd.f32 0.0, %v585
      %v587 = vpop.f32.mrf.mxu0
      %v588 = vadd.f32 0.0, %v587
      %589 = vmatmul.bf16.gmra.mxu0 %v423
      %v590 = vpop.f32.mrf.mxu0
      %v591 = vadd.f32 0.0, %v590
      %v592 = vpop.f32.mrf.mxu0
      %v593 = vadd.f32 0.0, %v592
      %594 = vmatmul.bf16.gmra.mxu0 %v424
      %v595 = vpop.f32.mrf.mxu0
      %v596 = vadd.f32 0.0, %v595
      %v597 = vpop.f32.mrf.mxu0
      %v598 = vadd.f32 0.0, %v597
      %599 = vmatmul.bf16.gmra.mxu0 %v425
      %v600 = vpop.f32.mrf.mxu0
      %v601 = vadd.f32 0.0, %v600
      %v602 = vpop.f32.mrf.mxu0
      %v603 = vadd.f32 0.0, %v602
      %604 = vmatmul.bf16.gmra.mxu0 %v426
      %v605 = vpop.f32.mrf.mxu0
      %v606 = vadd.f32 0.0, %v605
      %v607 = vpop.f32.mrf.mxu0
      %v608 = vadd.f32 0.0, %v607
      %609 = vmatmul.bf16.gmra.mxu0 %v427
      %v610 = vpop.f32.mrf.mxu0
      %v611 = vadd.f32 0.0, %v610
      %v612 = vpop.f32.mrf.mxu0
      %v613 = vadd.f32 0.0, %v612
      %614 = vmatmul.bf16.gmra.mxu0 %v428
      %v615 = vpop.f32.mrf.mxu0
      %v616 = vadd.f32 0.0, %v615
      %v617 = vpop.f32.mrf.mxu0
      %v618 = vadd.f32 0.0, %v617
      %619 = vmatmul.bf16.gmra.mxu0 %v429
      %v620 = vpop.f32.mrf.mxu0
      %v621 = vadd.f32 0.0, %v620
      %v622 = vpop.f32.mrf.mxu0
      %v623 = vadd.f32 0.0, %v622
      %624 = vmatmul.bf16.gmra.mxu0 %v430
      %v625 = vpop.f32.mrf.mxu0
      %v626 = vadd.f32 0.0, %v625
      %v627 = vpop.f32.mrf.mxu0
      %v628 = vadd.f32 0.0, %v627
      %629 = vmatmul.bf16.gmra.mxu0 %v431
      %v630 = vpop.f32.mrf.mxu0
      %v631 = vadd.f32 0.0, %v630
      %v632 = vpop.f32.mrf.mxu0
      %v633 = vadd.f32 0.0, %v632
      %634 = vmatmul.bf16.gmra.mxu0 %v432
      %v635 = vpop.f32.mrf.mxu0
      %v636 = vadd.f32 0.0, %v635
      %v637 = vpop.f32.mrf.mxu0
      %v638 = vadd.f32 0.0, %v637
      %639 = vmatmul.bf16.gmra.mxu0 %v433
      %v640 = vpop.f32.mrf.mxu0
      %v641 = vadd.f32 0.0, %v640
      %v642 = vpop.f32.mrf.mxu0
      %v643 = vadd.f32 0.0, %v642
      %644 = vmatmul.bf16.gmra.mxu0 %v434
      %v645 = vpop.f32.mrf.mxu0
      %v646 = vadd.f32 0.0, %v645
      %v647 = vpop.f32.mrf.mxu0
      %v648 = vadd.f32 0.0, %v647
      %649 = vmatmul.bf16.gmra.mxu0 %v435
      %v650 = vpop.f32.mrf.mxu0
      %v651 = vadd.f32 0.0, %v650
      %v652 = vpop.f32.mrf.mxu0
      %v653 = vadd.f32 0.0, %v652
      %654 = vdwg.mxu0
      %v655 = vpack.c.bf16 %v521, %v521
      %v656 = vpack.c.bf16 %v523, %v523
      %v657 = vpack.c.bf16 %v526, %v526
      %v658 = vpack.c.bf16 %v528, %v528
      %v659 = vpack.c.bf16 %v531, %v531
      %v660 = vpack.c.bf16 %v533, %v533
      %v661 = vpack.c.bf16 %v536, %v536
      %v662 = vpack.c.bf16 %v538, %v538
      %v663 = vpack.c.bf16 %v541, %v541
      %v664 = vpack.c.bf16 %v543, %v543
      %v665 = vpack.c.bf16 %v546, %v546
      %v666 = vpack.c.bf16 %v548, %v548
      %v667 = vpack.c.bf16 %v551, %v551
      %v668 = vpack.c.bf16 %v553, %v553
      %v669 = vpack.c.bf16 %v556, %v556
      %v670 = vpack.c.bf16 %v558, %v558
      %v671 = vpack.c.bf16 %v561, %v561
      %v672 = vpack.c.bf16 %v563, %v563
      %v673 = vpack.c.bf16 %v566, %v566
      %v674 = vpack.c.bf16 %v568, %v568
      %v675 = vpack.c.bf16 %v571, %v571
      %v676 = vpack.c.bf16 %v573, %v573
      %v677 = vpack.c.bf16 %v576, %v576
      %v678 = vpack.c.bf16 %v578, %v578
      %v679 = vpack.c.bf16 %v581, %v581
      %v680 = vpack.c.bf16 %v583, %v583
      %v681 = vpack.c.bf16 %v586, %v586
      %v682 = vpack.c.bf16 %v588, %v588
      %v683 = vpack.c.bf16 %v591, %v591
      %v684 = vpack.c.bf16 %v593, %v593
      %v685 = vpack.c.bf16 %v596, %v596
      %v686 = vpack.c.bf16 %v598, %v598
      %v687 = vpack.c.bf16 %v601, %v601
      %v688 = vpack.c.bf16 %v603, %v603
      %v689 = vpack.c.bf16 %v606, %v606
      %v690 = vpack.c.bf16 %v608, %v608
      %v691 = vpack.c.bf16 %v611, %v611
      %v692 = vpack.c.bf16 %v613, %v613
      %v693 = vpack.c.bf16 %v616, %v616
      %v694 = vpack.c.bf16 %v618, %v618
      %v695 = vpack.c.bf16 %v621, %v621
      %v696 = vpack.c.bf16 %v623, %v623
      %v697 = vpack.c.bf16 %v626, %v626
      %v698 = vpack.c.bf16 %v628, %v628
      %v699 = vpack.c.bf16 %v631, %v631
      %v700 = vpack.c.bf16 %v633, %v633
      %v701 = vpack.c.bf16 %v636, %v636
      %v702 = vpack.c.bf16 %v638, %v638
      %v703 = vpack.c.bf16 %v641, %v641
      %v704 = vpack.c.bf16 %v643, %v643
      %v705 = vpack.c.bf16 %v646, %v646
      %v706 = vpack.c.bf16 %v648, %v648
      %v707 = vpack.c.bf16 %v651, %v651
      %v708 = vpack.c.bf16 %v653, %v653
      %709 = vst [vmem:[%s221] sm:$0xf] %v655
      %710 = vst [vmem:[%s221 + $0x4] sm:$0xf] %v656
      %711 = vst [vmem:[%s221 + $0x8] sm:$0xf] %v657
      %712 = vst [vmem:[%s221 + $0xc] sm:$0xf] %v658
      %713 = vst [vmem:[%s221 + $0x10] sm:$0xf] %v659
      %714 = vst [vmem:[%s221 + $0x14] sm:$0xf] %v660
      %715 = vst [vmem:[%s221 + $0x18] sm:$0xf] %v661
      %716 = vst [vmem:[%s221 + $0x1c] sm:$0xf] %v662
      %717 = vst [vmem:[%s221 + $0x20] sm:$0xf] %v663
      %718 = vst [vmem:[%s221 + $0x24] sm:$0xf] %v664
      %719 = vst [vmem:[%s221 + $0x28] sm:$0xf] %v665
      %720 = vst [vmem:[%s221 + $0x2c] sm:$0xf] %v666
      %721 = vst [vmem:[%s221 + $0x30] sm:$0xf] %v667
      %722 = vst [vmem:[%s221 + $0x34] sm:$0xf] %v668
      %723 = vst [vmem:[%s221 + $0x38] sm:$0xf] %v669
      %724 = vst [vmem:[%s221 + $0x3c] sm:$0xf] %v670
      %725 = vst [vmem:[%s221 + $0x40] sm:$0xf] %v671
      %726 = vst [vmem:[%s221 + $0x44] sm:$0xf] %v672
      %727 = vst [vmem:[%s221 + $0x48] sm:$0xf] %v673
      %728 = vst [vmem:[%s221 + $0x4c] sm:$0xf] %v674
      %729 = vst [vmem:[%s221 + $0x50] sm:$0xf] %v675
      %730 = vst [vmem:[%s221 + $0x54] sm:$0xf] %v676
      %731 = vst [vmem:[%s221 + $0x58] sm:$0xf] %v677
      %732 = vst [vmem:[%s221 + $0x5c] sm:$0xf] %v678
      %733 = vst [vmem:[%s221 + $0x60] sm:$0xf] %v679
      %734 = vst [vmem:[%s221 + $0x64] sm:$0xf] %v680
      %735 = vst [vmem:[%s221 + $0x68] sm:$0xf] %v681
      %736 = vst [vmem:[%s221 + $0x6c] sm:$0xf] %v682
      %737 = vst [vmem:[%s221 + $0x70] sm:$0xf] %v683
      %738 = vst [vmem:[%s221 + $0x74] sm:$0xf] %v684
      %739 = vst [vmem:[%s221 + $0x78] sm:$0xf] %v685
      %740 = vst [vmem:[%s221 + $0x7c] sm:$0xf] %v686
      %741 = vst [vmem:[%s221 + $0x80] sm:$0xf] %v687
      %742 = vst [vmem:[%s221 + $0x84] sm:$0xf] %v688
      %743 = vst [vmem:[%s221 + $0x88] sm:$0xf] %v689
      %744 = vst [vmem:[%s221 + $0x8c] sm:$0xf] %v690
      %745 = vst [vmem:[%s221 + $0x90] sm:$0xf] %v691
      %746 = vst [vmem:[%s221 + $0x94] sm:$0xf] %v692
      %747 = vst [vmem:[%s221 + $0x98] sm:$0xf] %v693
      %748 = vst [vmem:[%s221 + $0x9c] sm:$0xf] %v694
      %749 = vst [vmem:[%s221 + $0xa0] sm:$0xf] %v695
      %750 = vst [vmem:[%s221 + $0xa4] sm:$0xf] %v696
      %751 = vst [vmem:[%s221 + $0xa8] sm:$0xf] %v697
      %752 = vst [vmem:[%s221 + $0xac] sm:$0xf] %v698
      %753 = vst [vmem:[%s221 + $0xb0] sm:$0xf] %v699
      %754 = vst [vmem:[%s221 + $0xb4] sm:$0xf] %v700
      %755 = vst [vmem:[%s221 + $0xb8] sm:$0xf] %v701
      %756 = vst [vmem:[%s221 + $0xbc] sm:$0xf] %v702
      %757 = vst [vmem:[%s221 + $0xc0] sm:$0xf] %v703
      %758 = vst [vmem:[%s221 + $0xc4] sm:$0xf] %v704
      %759 = vst [vmem:[%s221 + $0xc8] sm:$0xf] %v705
      %760 = vst [vmem:[%s221 + $0xcc] sm:$0xf] %v706
      %761 = vst [vmem:[%s221 + $0xd0] sm:$0xf] %v707
      %762 = vst [vmem:[%s221 + $0xd4] sm:$0xf] %v708
      %v763 = vadd.f32 %v521, %v523
      %v764 = vadd.f32 %v763, %v526
      %v765 = vadd.f32 %v764, %v528
      %v766 = vadd.f32 %v765, %v531
      %v767 = vadd.f32 %v766, %v533
      %v768 = vadd.f32 %v767, %v536
      %v769 = vadd.f32 %v768, %v538
      %v770 = vadd.f32 %v769, %v541
      %v771 = vadd.f32 %v770, %v543
      %v772 = vadd.f32 %v771, %v546
      %v773 = vadd.f32 %v772, %v548
      %v774 = vadd.f32 %v773, %v551
      %v775 = vadd.f32 %v774, %v553
      %v776 = vadd.f32 %v775, %v556
      %v777 = vadd.f32 %v776, %v558
      %v778 = vadd.f32 %v777, %v561
      %v779 = vadd.f32 %v778, %v563
      %v780 = vadd.f32 %v779, %v566
      %v781 = vadd.f32 %v780, %v568
      %v782 = vadd.f32 %v781, %v571
      %v783 = vadd.f32 %v782, %v573
      %v784 = vadd.f32 %v783, %v576
      %v785 = vadd.f32 %v784, %v578
      %v786 = vadd.f32 %v785, %v581
      %v787 = vadd.f32 %v786, %v583
      %v788 = vadd.f32 %v787, %v586
      %v789 = vadd.f32 %v788, %v588
      %v790 = vadd.f32 %v789, %v591
      %v791 = vadd.f32 %v790, %v593
      %v792 = vadd.f32 %v791, %v596
      %v793 = vadd.f32 %v792, %v598
      %v794 = vadd.f32 %v793, %v601
      %v795 = vadd.f32 %v794, %v603
      %v796 = vadd.f32 %v795, %v606
      %v797 = vadd.f32 %v796, %v608
      %v798 = vadd.f32 %v797, %v611
      %v799 = vadd.f32 %v798, %v613
      %v800 = vadd.f32 %v799, %v616
      %v801 = vadd.f32 %v800, %v618
      %v802 = vadd.f32 %v801, %v621
      %v803 = vadd.f32 %v802, %v623
      %v804 = vadd.f32 %v803, %v626
      %v805 = vadd.f32 %v804, %v628
      %v806 = vadd.f32 %v805, %v631
      %v807 = vadd.f32 %v806, %v633
      %v808 = vadd.f32 %v807, %v636
      %v809 = vadd.f32 %v808, %v638
      %v810 = vadd.f32 %v809, %v641
      %v811 = vadd.f32 %v810, %v643
      %v812 = vadd.f32 %v811, %v646
      %v813 = vadd.f32 %v812, %v648
      %v814 = vadd.f32 %v813, %v651
      %v815 = vadd.f32 %v814, %v653
      %v816 = vrot.slane %v815, 4
      %v817 = vadd.f32 %v815, %v816
      %v818 = vrot.slane %v817, 2
      %v819 = vadd.f32 %v817, %v818
      %v820 = vrot.slane %v819, 1
      %v821 = vadd.f32 %v819, %v820
      %822 = vst [vmem:[%s228] sm:$0x1] %v821
      %v823 = vmul.f32 %v521, %v521
      %v824 = vmul.f32 %v523, %v523
      %v825 = vmul.f32 %v526, %v526
      %v826 = vmul.f32 %v528, %v528
      %v827 = vmul.f32 %v531, %v531
      %v828 = vmul.f32 %v533, %v533
      %v829 = vmul.f32 %v536, %v536
      %v830 = vmul.f32 %v538, %v538
      %v831 = vmul.f32 %v541, %v541
      %v832 = vmul.f32 %v543, %v543
      %v833 = vmul.f32 %v546, %v546
      %v834 = vmul.f32 %v548, %v548
      %v835 = vmul.f32 %v551, %v551
      %v836 = vmul.f32 %v553, %v553
      %v837 = vmul.f32 %v556, %v556
      %v838 = vmul.f32 %v558, %v558
      %v839 = vmul.f32 %v561, %v561
      %v840 = vmul.f32 %v563, %v563
      %v841 = vmul.f32 %v566, %v566
      %v842 = vmul.f32 %v568, %v568
      %v843 = vmul.f32 %v571, %v571
      %v844 = vmul.f32 %v573, %v573
      %v845 = vmul.f32 %v576, %v576
      %v846 = vmul.f32 %v578, %v578
      %v847 = vmul.f32 %v581, %v581
      %v848 = vmul.f32 %v583, %v583
      %v849 = vmul.f32 %v586, %v586
      %v850 = vmul.f32 %v588, %v588
      %v851 = vmul.f32 %v591, %v591
      %v852 = vmul.f32 %v593, %v593
      %v853 = vmul.f32 %v596, %v596
      %v854 = vmul.f32 %v598, %v598
      %v855 = vmul.f32 %v601, %v601
      %v856 = vmul.f32 %v603, %v603
      %v857 = vmul.f32 %v606, %v606
      %v858 = vmul.f32 %v608, %v608
      %v859 = vmul.f32 %v611, %v611
      %v860 = vmul.f32 %v613, %v613
      %v861 = vmul.f32 %v616, %v616
      %v862 = vmul.f32 %v618, %v618
      %v863 = vmul.f32 %v621, %v621
      %v864 = vmul.f32 %v623, %v623
      %v865 = vmul.f32 %v626, %v626
      %v866 = vmul.f32 %v628, %v628
      %v867 = vmul.f32 %v631, %v631
      %v868 = vmul.f32 %v633, %v633
      %v869 = vmul.f32 %v636, %v636
      %v870 = vmul.f32 %v638, %v638
      %v871 = vmul.f32 %v641, %v641
      %v872 = vmul.f32 %v643, %v643
      %v873 = vmul.f32 %v646, %v646
      %v874 = vmul.f32 %v648, %v648
      %v875 = vmul.f32 %v651, %v651
      %v876 = vmul.f32 %v653, %v653
      %v877 = vadd.f32 %v823, %v824
      %v878 = vadd.f32 %v877, %v825
      %v879 = vadd.f32 %v878, %v826
      %v880 = vadd.f32 %v879, %v827
      %v881 = vadd.f32 %v880, %v828
      %v882 = vadd.f32 %v881, %v829
      %v883 = vadd.f32 %v882, %v830
      %v884 = vadd.f32 %v883, %v831
      %v885 = vadd.f32 %v884, %v832
      %v886 = vadd.f32 %v885, %v833
      %v887 = vadd.f32 %v886, %v834
      %v888 = vadd.f32 %v887, %v835
      %v889 = vadd.f32 %v888, %v836
      %v890 = vadd.f32 %v889, %v837
      %v891 = vadd.f32 %v890, %v838
      %v892 = vadd.f32 %v891, %v839
      %v893 = vadd.f32 %v892, %v840
      %v894 = vadd.f32 %v893, %v841
      %v895 = vadd.f32 %v894, %v842
      %v896 = vadd.f32 %v895, %v843
      %v897 = vadd.f32 %v896, %v844
      %v898 = vadd.f32 %v897, %v845
      %v899 = vadd.f32 %v898, %v846
      %v900 = vadd.f32 %v899, %v847
      %v901 = vadd.f32 %v900, %v848
      %v902 = vadd.f32 %v901, %v849
      %v903 = vadd.f32 %v902, %v850
      %v904 = vadd.f32 %v903, %v851
      %v905 = vadd.f32 %v904, %v852
      %v906 = vadd.f32 %v905, %v853
      %v907 = vadd.f32 %v906, %v854
      %v908 = vadd.f32 %v907, %v855
      %v909 = vadd.f32 %v908, %v856
      %v910 = vadd.f32 %v909, %v857
      %v911 = vadd.f32 %v910, %v858
      %v912 = vadd.f32 %v911, %v859
      %v913 = vadd.f32 %v912, %v860
      %v914 = vadd.f32 %v913, %v861
      %v915 = vadd.f32 %v914, %v862
      %v916 = vadd.f32 %v915, %v863
      %v917 = vadd.f32 %v916, %v864
      %v918 = vadd.f32 %v917, %v865
      %v919 = vadd.f32 %v918, %v866
      %v920 = vadd.f32 %v919, %v867
      %v921 = vadd.f32 %v920, %v868
      %v922 = vadd.f32 %v921, %v869
      %v923 = vadd.f32 %v922, %v870
      %v924 = vadd.f32 %v923, %v871
      %v925 = vadd.f32 %v924, %v872
      %v926 = vadd.f32 %v925, %v873
      %v927 = vadd.f32 %v926, %v874
      %v928 = vadd.f32 %v927, %v875
      %v929 = vadd.f32 %v928, %v876
      %v930 = vrot.slane %v929, 4
      %v931 = vadd.f32 %v929, %v930
      %v932 = vrot.slane %v931, 2
      %v933 = vadd.f32 %v931, %v932
      %v934 = vrot.slane %v933, 1
      %v935 = vadd.f32 %v933, %v934
      %936 = vst [vmem:[%s228 + $0x1] sm:$0x1] %v935
      %s937 = smul.u32 54, %s20
      %p938 = scmp.lt.s32.totalorder %s19, 1
      %s939 = scalar_select %p938, %s19, 1
      %p940 = scmp.lt.s32.totalorder %s937, 215
      %s941 = scalar_select %p940, %s937, 215
      %s942 = smul.addr %s939, 216
      %s943 = sadd.s32 %s941, %s942
      %s944 = smul.addr %s943, 4
      %s945 = scalar_lea.vmem %s2, %s944
      %s946 = smul.u32 %s19, 4
      %s947 = sadd.s32 %s946, %s20
      %p948 = scmp.lt.s32.totalorder %s947, 7
      %s949 = scalar_select %p948, %s947, 7
      %s950 = smul.addr %s949, 2
      %s951 = scalar_lea.vmem %s3, %s950
      // Predicated region
      $region29: #{expansion_block.2} parent=27 // pred_check
        %p952 = pneg %p96
      $region30: #{expansion_block.2} parent=27 // pred_check_branch
        %954 = sbr.rel (%p952) target = $region32
      $region31: #{expansion_block.2} parent=27 // pred_region
        %s955 = smul.u32 54, %s20
      $region32: #{expansion_block.2} parent=27 // pred_fallthru
        _
      // Predicated region
      $region33: #{expansion_block.2} parent=27 // pred_check
        %p956 = pneg %p126
      $region34: #{expansion_block.2} parent=27 // pred_check_branch
        %958 = sbr.rel (%p956) target = $region36
      $region35: #{expansion_block.2} parent=27 // pred_region
        %s959 = smul.u32 %s19, 4
        %s960 = sadd.s32 %s959, %s20
      $region36: #{expansion_block.2} parent=27 // pred_fallthru
        _
    $region28: #{expansion_block.2} parent=5 // pred_fallthru
      _
    %p961 = scmp.le.s32.totalorder 2, %s10
    // Predicated region
    $region37: #{expansion_block.2} parent=5 // pred_check
      %p962 = pneg %p961
    $region38: #{expansion_block.2} parent=5 // pred_check_branch
      %964 = sbr.rel (%p962) target = $region40
    $region39: #{expansion_block.2} parent=5 // pred_region
      %s965 = ssub.s32 %s10, 2
      // Predicated region
      $region41: #{expansion_block.2} parent=39 // pred_check
        %p966 = pneg %p102
      $region42: #{expansion_block.2} parent=39 // pred_check_branch
        %968 = sbr.rel (%p966) target = $region44
      $region43: #{expansion_block.2} parent=39 // pred_region
        %s969 = smul.u32 54, %s22
        %p970 = scmp.lt.s32.totalorder %s21, 1
        %s971 = scalar_select %p970, %s21, 1
        %p972 = scmp.lt.s32.totalorder %s969, 215
        %s973 = scalar_select %p972, %s969, 215
        %s974 = smul.addr %s971, 216
        %s975 = sadd.s32 %s973, %s974
        %s976 = smul.addr %s975, 4
        %s977 = scalar_lea.vmem %s2, %s976
      $region44: #{expansion_block.2} parent=39 // pred_fallthru
        _
      // Predicated region
      $region45: #{expansion_block.2} parent=39 // pred_check
        %p978 = pneg %p132
      $region46: #{expansion_block.2} parent=39 // pred_check_branch
        %980 = sbr.rel (%p978) target = $region48
      $region47: #{expansion_block.2} parent=39 // pred_region
        %s981 = smul.u32 %s21, 4
        %s982 = sadd.s32 %s981, %s22
        %p983 = scmp.lt.s32.totalorder %s982, 7
        %s984 = scalar_select %p983, %s982, 7
        %s985 = smul.addr %s984, 2
        %s986 = scalar_lea.vmem %s3, %s985
      $region48: #{expansion_block.2} parent=39 // pred_fallthru
        _
    $region40: #{expansion_block.2} parent=5 // pred_fallthru
      _
  $region6: #{expansion_block.2} parent=0 // loop_footer
    %s14 = sadd.s32 1, %s10
  $region7: #{expansion_block.2} parent=0 // loop_footer_branch
    %9 = sbr.rel target = $region3
  $region8: #{expansion_block.2} parent=0 // loop_exit
    _

</llo_original>
